<compile_context>
chip_gen: v7x
topology: tpu7x:2x2x1
jax: 0.10.0
libtpu: 0.0.40
codegen_flags: <defaults>
</compile_context>

<pallas_src>
import jax
import jax.numpy as jnp
from jax.experimental import pallas as pl
from jax.experimental.pallas import tpu as pltpu

TILE_M = 512  # rows per grid step; 4 x 512 x 250 bf16 operand tile ~= 0.5 MiB


# ----------------------------- Pallas kernels ------------------------------ #

def _conv_pool_relu_kernel(x_ref, w_ref, b_ref, o_ref):
    """Fused conv(as matmul) + bias + 2x2 maxpool + relu.

    x: (4, tm, K)  -- 4 pool-window candidates of im2col patches (bf16)
    w: (K, N)      -- conv weight, (kh, kw, cin) x cout (bf16)
    b: (1, N)      -- conv bias (f32)
    o: (tm, N)     -- pooled + relu'd activations
    """
    w = w_ref[...]
    acc = jnp.dot(x_ref[0], w, preferred_element_type=jnp.float32)
    for c in range(1, 4):  # static unroll over the 4 pool candidates
        acc = jnp.maximum(
            acc, jnp.dot(x_ref[c], w, preferred_element_type=jnp.float32))
    o_ref[...] = jnp.maximum(acc + b_ref[...], 0.0).astype(o_ref.dtype)


def _fc_tail_kernel(h_ref, w1_ref, b1_ref, w2_ref, b2_ref, o_ref):
    """Fused fc1 -> relu -> [dropout=identity] -> fc2 -> log_softmax.

    h: (tb, 320)  w1: (320, 50)  b1: (1, 50)  w2: (50, 10)  b2: (1, 10)
    o: (tb, 10) log-probabilities (f32)
    """
    h1 = jnp.dot(h_ref[...], w1_ref[...], preferred_element_type=jnp.float32)
    h1 = jnp.maximum(h1 + b1_ref[...], 0.0)
    logits = jnp.dot(h1.astype(w2_ref.dtype), w2_ref[...],
                     preferred_element_type=jnp.float32) + b2_ref[...]
    m = jnp.max(logits, axis=1, keepdims=True)
    s = logits - m
    o_ref[...] = (s - jnp.log(jnp.sum(jnp.exp(s), axis=1, keepdims=True))
                  ).astype(o_ref.dtype)


# ------------------------------- JAX glue ---------------------------------- #

def im2col_pooled(x_nhwc, k):
    """Valid kxk patches, grouped by 2x2 pooling window.

    Returns (4, B*Hp*Wp, k*k*C) where axis 0 enumerates the 4 positions of
    each 2x2 pool window and K order is (kh, kw, cin) -- matching the torch
    conv weight (cout, cin, kh, kw) transposed to (kh, kw, cin, cout).
    """
    B, H, W, C = x_nhwc.shape
    Ho, Wo = H - k + 1, W - k + 1            # conv output (must be even)
    Hp, Wp = Ho // 2, Wo // 2                # pooled output
    cols = [x_nhwc[:, i:i + Ho, j:j + Wo, :] for i in range(k) for j in range(k)]
    patches = jnp.concatenate(cols, axis=-1)               # (B, Ho, Wo, k*k*C)
    patches = patches.reshape(B, Hp, 2, Wp, 2, k * k * C)
    patches = jnp.transpose(patches, (2, 4, 0, 1, 3, 5))   # (2, 2, B, Hp, Wp, K)
    return patches.reshape(4, B * Hp * Wp, k * k * C), (B, Hp, Wp)


def conv_pool_relu(x_nhwc, w_conv_torch, b_conv, k=5, tile_m=TILE_M):
    """conv(k x k, valid) + bias + maxpool(2) + relu, fused in one kernel."""
    B, H, W, C = x_nhwc.shape
    cout = w_conv_torch.shape[0]
    patches4, (B, Hp, Wp) = im2col_pooled(x_nhwc, k)        # (4, M, K)
    Kdim = k * k * C
    M = B * Hp * Wp
    w = jnp.transpose(w_conv_torch, (2, 3, 1, 0)).reshape(Kdim, cout)

    if M <= tile_m:
        tm, Mp = M, M
    else:
        tm = tile_m
        Mp = pl.cdiv(M, tm) * tm
        if Mp != M:
            patches4 = jnp.pad(patches4, ((0, 0), (0, Mp - M), (0, 0)))

    out = pl.pallas_call(
        _conv_pool_relu_kernel,
        out_shape=jax.ShapeDtypeStruct((Mp, cout), jnp.bfloat16),
        grid=(Mp // tm,),
        in_specs=[
            pl.BlockSpec((4, tm, Kdim), lambda i: (0, i, 0)),
            pl.BlockSpec((Kdim, cout), lambda i: (0, 0)),
            pl.BlockSpec((1, cout), lambda i: (0, 0)),
        ],
        out_specs=pl.BlockSpec((tm, cout), lambda i: (i, 0)),
        compiler_params=pltpu.CompilerParams(
            dimension_semantics=("parallel",)),
    )(patches4.astype(jnp.bfloat16), w.astype(jnp.bfloat16),
      b_conv.reshape(1, cout).astype(jnp.float32))

    return out[:M].reshape(B, Hp, Wp, cout)


def fc_tail(h, w_fc1_nhwc, b_fc1, w_fc2, b_fc2, tile_b=TILE_M):
    """fc1(320->50) + relu + fc2(50->10) + log_softmax, fused in one kernel."""
    B, D = h.shape                  # D = 320
    H1 = w_fc1_nhwc.shape[0]        # 50
    N = w_fc2.shape[0]              # 10
    w1 = w_fc1_nhwc.T               # (320, 50)
    w2 = w_fc2.T                    # (50, 10)

    if B <= tile_b:
        tb, Bp, hp = B, B, h
    else:
        tb = tile_b
        Bp = pl.cdiv(B, tb) * tb
        hp = jnp.pad(h, ((0, Bp - B), (0, 0)))

    out = pl.pallas_call(
        _fc_tail_kernel,
        out_shape=jax.ShapeDtypeStruct((Bp, N), jnp.float32),
        grid=(Bp // tb,),
        in_specs=[
            pl.BlockSpec((tb, D), lambda i: (i, 0)),
            pl.BlockSpec((D, H1), lambda i: (0, 0)),
            pl.BlockSpec((1, H1), lambda i: (0, 0)),
            pl.BlockSpec((H1, N), lambda i: (0, 0)),
            pl.BlockSpec((1, N), lambda i: (0, 0)),
        ],
        out_specs=pl.BlockSpec((tb, N), lambda i: (i, 0)),
        compiler_params=pltpu.CompilerParams(
            dimension_semantics=("parallel",)),
    )(hp.astype(jnp.bfloat16), w1.astype(jnp.bfloat16),
      b_fc1.reshape(1, H1).astype(jnp.float32),
      w2.astype(jnp.bfloat16), b_fc2.reshape(1, N).astype(jnp.float32))

    return out[:B]


def init_params(key):
    """Deterministic init mimicking torch's default U(-1/sqrt(fan_in), ...)."""
    ks = jax.random.split(key, 8)

    def u(k, shape, fan_in):
        bound = float(fan_in) ** -0.5
        return jax.random.uniform(k, shape, jnp.float32, -bound, bound)

    return {
        # torch layouts: conv weight (cout, cin, kh, kw); linear weight (out, in)
        "w_conv1": u(ks[0], (10, 1, 5, 5), 1 * 5 * 5),
        "b_conv1": u(ks[1], (10,), 1 * 5 * 5),
        "w_conv2": u(ks[2], (20, 10, 5, 5), 10 * 5 * 5),
        "b_conv2": u(ks[3], (20,), 10 * 5 * 5),
        "w_fc1":   u(ks[4], (50, 320), 320),
        "b_fc1":   u(ks[5], (50,), 320),
        "w_fc2":   u(ks[6], (10, 50), 50),
        "b_fc2":   u(ks[7], (10,), 50),
    }


def net_forward(params, x_nchw):
    """x_nchw: (B, 1, 28, 28) float32, PyTorch layout. Returns (B, 10) log-probs."""
    x = jnp.transpose(x_nchw, (0, 2, 3, 1)).astype(jnp.bfloat16)   # NHWC

    # conv1(1->10,k5) + maxpool(2) + relu  (single fused kernel)
    y = conv_pool_relu(x, params["w_conv1"], params["b_conv1"])    # (B,12,12,10)

    # conv2(10->20,k5) + maxpool(2) + relu (single fused kernel)
    # TODO(synk): training-mode Dropout2d / F.dropout not implemented
    # (eval-mode semantics = identity).
    y = conv_pool_relu(y, params["w_conv2"], params["b_conv2"])    # (B,4,4,20)

    B = y.shape[0]
    h = y.reshape(B, 320)   # NHWC flatten order (h, w, c)

    # Fold torch's NCHW flatten (c, h, w) into fc1's weight columns so no
    # runtime activation transpose is needed (trace-time permutation).
    w_fc1_nhwc = (params["w_fc1"].reshape(50, 20, 4, 4)
                  .transpose(0, 2, 3, 1).reshape(50, 320))

    # fc1 -> relu -> fc2 -> log_softmax, single fused kernel
    return fc_tail(h, w_fc1_nhwc, params["b_fc1"],
                   params["w_fc2"], params["b_fc2"])


if __name__ == "__main__":
    key = jax.random.PRNGKey(0)
    pkey, xkey = jax.random.split(key)
    params = init_params(pkey)
    # MNIST-style input: batch=2, 1 channel, 28x28 (required for 320-dim flatten)
    x = jax.random.normal(xkey, (2, 1, 28, 28), jnp.float32)

    out = jax.jit(net_forward)(params, x)
    out = jax.block_until_ready(out)

    assert out.shape == (2, 10) and out.dtype == jnp.float32
    # log_softmax rows must exponentiate-and-sum to ~1
    assert bool(jnp.all(jnp.abs(jnp.sum(jnp.exp(out), axis=1) - 1.0) < 1e-4))
    print("KERNEL_OK")
</pallas_src>

<mosaic_0001>
module attributes {stable_mosaic.version = 11 : i64} {
  func.func @_conv_pool_relu_kernel(%arg0: i32, %arg1: memref<4x288x25xbf16, #tpu.memory_space<vmem>>, %arg2: memref<25x10xbf16, #tpu.memory_space<vmem>>, %arg3: memref<1x10xf32, #tpu.memory_space<vmem>>, %arg4: memref<288x10xbf16, #tpu.memory_space<vmem>>) attributes {dimension_semantics = [#tpu.dimension_semantics<parallel>], iteration_bounds = array<i64: 1>, scalar_prefetch = 0 : i64, scratch_operands = 0 : i64, tpu.core_type = #tpu.core_type<tc>, window_params = [{transform_indices = @transform_0, window_bounds = array<i64: 4, 288, 25>}, {pipeline_mode = #tpu.pipeline_mode<synchronous>, transform_indices = @transform_1, window_bounds = array<i64: 25, 10>}, {pipeline_mode = #tpu.pipeline_mode<synchronous>, transform_indices = @transform_2, window_bounds = array<i64: 1, 10>}, {transform_indices = @transform_3, window_bounds = array<i64: 288, 10>}]} {
    %c0 = arith.constant 0 : index
    %c0_0 = arith.constant 0 : index
    %0 = vector.load %arg2[%c0, %c0_0] : memref<25x10xbf16, #tpu.memory_space<vmem>>, vector<25x10xbf16>
    %c0_1 = arith.constant 0 : index
    %c0_2 = arith.constant 0 : index
    %c0_3 = arith.constant 0 : index
    %1 = vector.load %arg1[%c0_1, %c0_2, %c0_3] : memref<4x288x25xbf16, #tpu.memory_space<vmem>>, vector<1x288x25xbf16>
    %2 = vector.shape_cast %1 : vector<1x288x25xbf16> to vector<288x25xbf16>
    %cst = arith.constant dense<0.000000e+00> : vector<288x10xf32>
    %3 = tpu.matmul %2, %0, %cst {dimension_numbers = #tpu.dot_dimension_numbers<[1], [0], [0], [1], [0, 0, 1, 1], [], []>} : vector<288x25xbf16>, vector<25x10xbf16>, vector<288x10xf32> -> vector<288x10xf32>
    %c1 = arith.constant 1 : index
    %c0_4 = arith.constant 0 : index
    %c0_5 = arith.constant 0 : index
    %4 = vector.load %arg1[%c1, %c0_4, %c0_5] : memref<4x288x25xbf16, #tpu.memory_space<vmem>>, vector<1x288x25xbf16>
    %5 = vector.shape_cast %4 : vector<1x288x25xbf16> to vector<288x25xbf16>
    %cst_6 = arith.constant dense<0.000000e+00> : vector<288x10xf32>
    %6 = tpu.matmul %5, %0, %cst_6 {dimension_numbers = #tpu.dot_dimension_numbers<[1], [0], [0], [1], [0, 0, 1, 1], [], []>} : vector<288x25xbf16>, vector<25x10xbf16>, vector<288x10xf32> -> vector<288x10xf32>
    %7 = arith.maximumf %3, %6 : vector<288x10xf32>
    %c2 = arith.constant 2 : index
    %c0_7 = arith.constant 0 : index
    %c0_8 = arith.constant 0 : index
    %8 = vector.load %arg1[%c2, %c0_7, %c0_8] : memref<4x288x25xbf16, #tpu.memory_space<vmem>>, vector<1x288x25xbf16>
    %9 = vector.shape_cast %8 : vector<1x288x25xbf16> to vector<288x25xbf16>
    %cst_9 = arith.constant dense<0.000000e+00> : vector<288x10xf32>
    %10 = tpu.matmul %9, %0, %cst_9 {dimension_numbers = #tpu.dot_dimension_numbers<[1], [0], [0], [1], [0, 0, 1, 1], [], []>} : vector<288x25xbf16>, vector<25x10xbf16>, vector<288x10xf32> -> vector<288x10xf32>
    %11 = arith.maximumf %7, %10 : vector<288x10xf32>
    %c3 = arith.constant 3 : index
    %c0_10 = arith.constant 0 : index
    %c0_11 = arith.constant 0 : index
    %12 = vector.load %arg1[%c3, %c0_10, %c0_11] : memref<4x288x25xbf16, #tpu.memory_space<vmem>>, vector<1x288x25xbf16>
    %13 = vector.shape_cast %12 : vector<1x288x25xbf16> to vector<288x25xbf16>
    %cst_12 = arith.constant dense<0.000000e+00> : vector<288x10xf32>
    %14 = tpu.matmul %13, %0, %cst_12 {dimension_numbers = #tpu.dot_dimension_numbers<[1], [0], [0], [1], [0, 0, 1, 1], [], []>} : vector<288x25xbf16>, vector<25x10xbf16>, vector<288x10xf32> -> vector<288x10xf32>
    %15 = arith.maximumf %11, %14 : vector<288x10xf32>
    %c0_13 = arith.constant 0 : index
    %c0_14 = arith.constant 0 : index
    %16 = vector.load %arg3[%c0_13, %c0_14] : memref<1x10xf32, #tpu.memory_space<vmem>>, vector<1x10xf32>
    %17 = vector.broadcast %16 : vector<1x10xf32> to vector<288x10xf32>
    %18 = arith.addf %15, %17 : vector<288x10xf32>
    %cst_15 = arith.constant 0.000000e+00 : f32
    %19 = vector.broadcast %cst_15 : f32 to vector<288x10xf32>
    %20 = arith.maximumf %18, %19 : vector<288x10xf32>
    %21 = arith.truncf %20 : vector<288x10xf32> to vector<288x10xbf16>
    %c0_16 = arith.constant 0 : index
    %c0_17 = arith.constant 0 : index
    %22 = vector.load %arg4[%c0_16, %c0_17] : memref<288x10xbf16, #tpu.memory_space<vmem>>, vector<288x10xbf16>
    tpu.vector_store %arg4[%c0_16, %c0_17], %21 {strides = array<i32>} : memref<288x10xbf16, #tpu.memory_space<vmem>>, vector<288x10xbf16>,
    return
  }
  func.func @transform_0(%arg0: i32) -> (i32, i32, i32) {
    %c0_i32 = arith.constant 0 : i32
    %c0_i32_0 = arith.constant 0 : i32
    %c0_i32_1 = arith.constant 0 : i32
    return %c0_i32, %arg0, %c0_i32_0 : i32, i32, i32
  }
  func.func @transform_1(%arg0: i32) -> (i32, i32) {
    %c0_i32 = arith.constant 0 : i32
    %c0_i32_0 = arith.constant 0 : i32
    %c0_i32_1 = arith.constant 0 : i32
    return %c0_i32, %c0_i32_0 : i32, i32
  }
  func.func @transform_2(%arg0: i32) -> (i32, i32) {
    %c0_i32 = arith.constant 0 : i32
    %c0_i32_0 = arith.constant 0 : i32
    %c0_i32_1 = arith.constant 0 : i32
    return %c0_i32, %c0_i32_0 : i32, i32
  }
  func.func @transform_3(%arg0: i32) -> (i32, i32) {
    %c0_i32 = arith.constant 0 : i32
    %c0_i32_0 = arith.constant 0 : i32
    return %arg0, %c0_i32 : i32, i32
  }
}

module attributes {stable_mosaic.version = 11 : i64} {
  func.func @_conv_pool_relu_kernel(%arg0: i32, %arg1: memref<4x32x250xbf16, #tpu.memory_space<vmem>>, %arg2: memref<250x20xbf16, #tpu.memory_space<vmem>>, %arg3: memref<1x20xf32, #tpu.memory_space<vmem>>, %arg4: memref<32x20xbf16, #tpu.memory_space<vmem>>) attributes {dimension_semantics = [#tpu.dimension_semantics<parallel>], iteration_bounds = array<i64: 1>, scalar_prefetch = 0 : i64, scratch_operands = 0 : i64, tpu.core_type = #tpu.core_type<tc>, window_params = [{transform_indices = @transform_0, window_bounds = array<i64: 4, 32, 250>}, {pipeline_mode = #tpu.pipeline_mode<synchronous>, transform_indices = @transform_1, window_bounds = array<i64: 250, 20>}, {pipeline_mode = #tpu.pipeline_mode<synchronous>, transform_indices = @transform_2, window_bounds = array<i64: 1, 20>}, {transform_indices = @transform_3, window_bounds = array<i64: 32, 20>}]} {
    %c0 = arith.constant 0 : index
    %c0_0 = arith.constant 0 : index
    %0 = vector.load %arg2[%c0, %c0_0] : memref<250x20xbf16, #tpu.memory_space<vmem>>, vector<250x20xbf16>
    %c0_1 = arith.constant 0 : index
    %c0_2 = arith.constant 0 : index
    %c0_3 = arith.constant 0 : index
    %1 = vector.load %arg1[%c0_1, %c0_2, %c0_3] : memref<4x32x250xbf16, #tpu.memory_space<vmem>>, vector<1x32x250xbf16>
    %2 = vector.shape_cast %1 : vector<1x32x250xbf16> to vector<32x250xbf16>
    %cst = arith.constant dense<0.000000e+00> : vector<32x20xf32>
    %3 = tpu.matmul %2, %0, %cst {dimension_numbers = #tpu.dot_dimension_numbers<[1], [0], [0], [1], [0, 0, 1, 1], [], []>} : vector<32x250xbf16>, vector<250x20xbf16>, vector<32x20xf32> -> vector<32x20xf32>
    %c1 = arith.constant 1 : index
    %c0_4 = arith.constant 0 : index
    %c0_5 = arith.constant 0 : index
    %4 = vector.load %arg1[%c1, %c0_4, %c0_5] : memref<4x32x250xbf16, #tpu.memory_space<vmem>>, vector<1x32x250xbf16>
    %5 = vector.shape_cast %4 : vector<1x32x250xbf16> to vector<32x250xbf16>
    %cst_6 = arith.constant dense<0.000000e+00> : vector<32x20xf32>
    %6 = tpu.matmul %5, %0, %cst_6 {dimension_numbers = #tpu.dot_dimension_numbers<[1], [0], [0], [1], [0, 0, 1, 1], [], []>} : vector<32x250xbf16>, vector<250x20xbf16>, vector<32x20xf32> -> vector<32x20xf32>
    %7 = arith.maximumf %3, %6 : vector<32x20xf32>
    %c2 = arith.constant 2 : index
    %c0_7 = arith.constant 0 : index
    %c0_8 = arith.constant 0 : index
    %8 = vector.load %arg1[%c2, %c0_7, %c0_8] : memref<4x32x250xbf16, #tpu.memory_space<vmem>>, vector<1x32x250xbf16>
    %9 = vector.shape_cast %8 : vector<1x32x250xbf16> to vector<32x250xbf16>
    %cst_9 = arith.constant dense<0.000000e+00> : vector<32x20xf32>
    %10 = tpu.matmul %9, %0, %cst_9 {dimension_numbers = #tpu.dot_dimension_numbers<[1], [0], [0], [1], [0, 0, 1, 1], [], []>} : vector<32x250xbf16>, vector<250x20xbf16>, vector<32x20xf32> -> vector<32x20xf32>
    %11 = arith.maximumf %7, %10 : vector<32x20xf32>
    %c3 = arith.constant 3 : index
    %c0_10 = arith.constant 0 : index
    %c0_11 = arith.constant 0 : index
    %12 = vector.load %arg1[%c3, %c0_10, %c0_11] : memref<4x32x250xbf16, #tpu.memory_space<vmem>>, vector<1x32x250xbf16>
    %13 = vector.shape_cast %12 : vector<1x32x250xbf16> to vector<32x250xbf16>
    %cst_12 = arith.constant dense<0.000000e+00> : vector<32x20xf32>
    %14 = tpu.matmul %13, %0, %cst_12 {dimension_numbers = #tpu.dot_dimension_numbers<[1], [0], [0], [1], [0, 0, 1, 1], [], []>} : vector<32x250xbf16>, vector<250x20xbf16>, vector<32x20xf32> -> vector<32x20xf32>
    %15 = arith.maximumf %11, %14 : vector<32x20xf32>
    %c0_13 = arith.constant 0 : index
    %c0_14 = arith.constant 0 : index
    %16 = vector.load %arg3[%c0_13, %c0_14] : memref<1x20xf32, #tpu.memory_space<vmem>>, vector<1x20xf32>
    %17 = vector.broadcast %16 : vector<1x20xf32> to vector<32x20xf32>
    %18 = arith.addf %15, %17 : vector<32x20xf32>
    %cst_15 = arith.constant 0.000000e+00 : f32
    %19 = vector.broadcast %cst_15 : f32 to vector<32x20xf32>
    %20 = arith.maximumf %18, %19 : vector<32x20xf32>
    %21 = arith.truncf %20 : vector<32x20xf32> to vector<32x20xbf16>
    %c0_16 = arith.constant 0 : index
    %c0_17 = arith.constant 0 : index
    %22 = vector.load %arg4[%c0_16, %c0_17] : memref<32x20xbf16, #tpu.memory_space<vmem>>, vector<32x20xbf16>
    tpu.vector_store %arg4[%c0_16, %c0_17], %21 {strides = array<i32>} : memref<32x20xbf16, #tpu.memory_space<vmem>>, vector<32x20xbf16>,
    return
  }
  func.func @transform_0(%arg0: i32) -> (i32, i32, i32) {
    %c0_i32 = arith.constant 0 : i32
    %c0_i32_0 = arith.constant 0 : i32
    %c0_i32_1 = arith.constant 0 : i32
    return %c0_i32, %arg0, %c0_i32_0 : i32, i32, i32
  }
  func.func @transform_1(%arg0: i32) -> (i32, i32) {
    %c0_i32 = arith.constant 0 : i32
    %c0_i32_0 = arith.constant 0 : i32
    %c0_i32_1 = arith.constant 0 : i32
    return %c0_i32, %c0_i32_0 : i32, i32
  }
  func.func @transform_2(%arg0: i32) -> (i32, i32) {
    %c0_i32 = arith.constant 0 : i32
    %c0_i32_0 = arith.constant 0 : i32
    %c0_i32_1 = arith.constant 0 : i32
    return %c0_i32, %c0_i32_0 : i32, i32
  }
  func.func @transform_3(%arg0: i32) -> (i32, i32) {
    %c0_i32 = arith.constant 0 : i32
    %c0_i32_0 = arith.constant 0 : i32
    return %arg0, %c0_i32 : i32, i32
  }
}

module attributes {stable_mosaic.version = 11 : i64} {
  func.func @_fc_tail_kernel(%arg0: i32, %arg1: memref<2x320xbf16, #tpu.memory_space<vmem>>, %arg2: memref<320x50xbf16, #tpu.memory_space<vmem>>, %arg3: memref<1x50xf32, #tpu.memory_space<vmem>>, %arg4: memref<50x10xbf16, #tpu.memory_space<vmem>>, %arg5: memref<1x10xf32, #tpu.memory_space<vmem>>, %arg6: memref<2x10xf32, #tpu.memory_space<vmem>>) attributes {dimension_semantics = [#tpu.dimension_semantics<parallel>], iteration_bounds = array<i64: 1>, scalar_prefetch = 0 : i64, scratch_operands = 0 : i64, tpu.core_type = #tpu.core_type<tc>, window_params = [{transform_indices = @transform_0, window_bounds = array<i64: 2, 320>}, {pipeline_mode = #tpu.pipeline_mode<synchronous>, transform_indices = @transform_1, window_bounds = array<i64: 320, 50>}, {pipeline_mode = #tpu.pipeline_mode<synchronous>, transform_indices = @transform_2, window_bounds = array<i64: 1, 50>}, {pipeline_mode = #tpu.pipeline_mode<synchronous>, transform_indices = @transform_3, window_bounds = array<i64: 50, 10>}, {pipeline_mode = #tpu.pipeline_mode<synchronous>, transform_indices = @transform_4, window_bounds = array<i64: 1, 10>}, {transform_indices = @transform_5, window_bounds = array<i64: 2, 10>}]} {
    %c0 = arith.constant 0 : index
    %c0_0 = arith.constant 0 : index
    %0 = vector.load %arg1[%c0, %c0_0] : memref<2x320xbf16, #tpu.memory_space<vmem>>, vector<2x320xbf16>
    %c0_1 = arith.constant 0 : index
    %c0_2 = arith.constant 0 : index
    %1 = vector.load %arg2[%c0_1, %c0_2] : memref<320x50xbf16, #tpu.memory_space<vmem>>, vector<320x50xbf16>
    %cst = arith.constant dense<0.000000e+00> : vector<2x50xf32>
    %2 = tpu.matmul %0, %1, %cst {dimension_numbers = #tpu.dot_dimension_numbers<[1], [0], [0], [1], [0, 0, 1, 1], [], []>} : vector<2x320xbf16>, vector<320x50xbf16>, vector<2x50xf32> -> vector<2x50xf32>
    %c0_3 = arith.constant 0 : index
    %c0_4 = arith.constant 0 : index
    %3 = vector.load %arg3[%c0_3, %c0_4] : memref<1x50xf32, #tpu.memory_space<vmem>>, vector<1x50xf32>
    %4 = vector.broadcast %3 : vector<1x50xf32> to vector<2x50xf32>
    %5 = arith.addf %2, %4 : vector<2x50xf32>
    %cst_5 = arith.constant 0.000000e+00 : f32
    %6 = vector.broadcast %cst_5 : f32 to vector<2x50xf32>
    %7 = arith.maximumf %5, %6 : vector<2x50xf32>
    %8 = arith.truncf %7 : vector<2x50xf32> to vector<2x50xbf16>
    %c0_6 = arith.constant 0 : index
    %c0_7 = arith.constant 0 : index
    %9 = vector.load %arg4[%c0_6, %c0_7] : memref<50x10xbf16, #tpu.memory_space<vmem>>, vector<50x10xbf16>
    %cst_8 = arith.constant dense<0.000000e+00> : vector<2x10xf32>
    %10 = tpu.matmul %8, %9, %cst_8 {dimension_numbers = #tpu.dot_dimension_numbers<[1], [0], [0], [1], [0, 0, 1, 1], [], []>} : vector<2x50xbf16>, vector<50x10xbf16>, vector<2x10xf32> -> vector<2x10xf32>
    %c0_9 = arith.constant 0 : index
    %c0_10 = arith.constant 0 : index
    %11 = vector.load %arg5[%c0_9, %c0_10] : memref<1x10xf32, #tpu.memory_space<vmem>>, vector<1x10xf32>
    %12 = vector.broadcast %11 : vector<1x10xf32> to vector<2x10xf32>
    %13 = arith.addf %10, %12 : vector<2x10xf32>
    %cst_11 = arith.constant dense<0xFF800000> : vector<2xf32>
    %14 = vector.multi_reduction <maximumf>, %13, %cst_11 [1] : vector<2x10xf32> to vector<2xf32>
    %15 = vector.shape_cast %14 : vector<2xf32> to vector<2x1xf32>
    %16 = vector.broadcast %15 : vector<2x1xf32> to vector<2x10xf32>
    %17 = arith.subf %13, %16 : vector<2x10xf32>
    %18 = math.exp %17 : vector<2x10xf32>
    %cst_12 = arith.constant dense<0.000000e+00> : vector<2xf32>
    %19 = vector.multi_reduction <add>, %18, %cst_12 [1] : vector<2x10xf32> to vector<2xf32>
    %20 = vector.shape_cast %19 : vector<2xf32> to vector<2x1xf32>
    %21 = math.log %20 : vector<2x1xf32>
    %22 = vector.broadcast %21 : vector<2x1xf32> to vector<2x10xf32>
    %23 = arith.subf %17, %22 : vector<2x10xf32>
    %c0_13 = arith.constant 0 : index
    %c0_14 = arith.constant 0 : index
    %24 = vector.load %arg6[%c0_13, %c0_14] : memref<2x10xf32, #tpu.memory_space<vmem>>, vector<2x10xf32>
    tpu.vector_store %arg6[%c0_13, %c0_14], %23 {strides = array<i32>} : memref<2x10xf32, #tpu.memory_space<vmem>>, vector<2x10xf32>,
    return
  }
  func.func @transform_0(%arg0: i32) -> (i32, i32) {
    %c0_i32 = arith.constant 0 : i32
    %c0_i32_0 = arith.constant 0 : i32
    return %arg0, %c0_i32 : i32, i32
  }
  func.func @transform_1(%arg0: i32) -> (i32, i32) {
    %c0_i32 = arith.constant 0 : i32
    %c0_i32_0 = arith.constant 0 : i32
    %c0_i32_1 = arith.constant 0 : i32
    return %c0_i32, %c0_i32_0 : i32, i32
  }
  func.func @transform_2(%arg0: i32) -> (i32, i32) {
    %c0_i32 = arith.constant 0 : i32
    %c0_i32_0 = arith.constant 0 : i32
    %c0_i32_1 = arith.constant 0 : i32
    return %c0_i32, %c0_i32_0 : i32, i32
  }
  func.func @transform_3(%arg0: i32) -> (i32, i32) {
    %c0_i32 = arith.constant 0 : i32
    %c0_i32_0 = arith.constant 0 : i32
    %c0_i32_1 = arith.constant 0 : i32
    return %c0_i32, %c0_i32_0 : i32, i32
  }
  func.func @transform_4(%arg0: i32) -> (i32, i32) {
    %c0_i32 = arith.constant 0 : i32
    %c0_i32_0 = arith.constant 0 : i32
    %c0_i32_1 = arith.constant 0 : i32
    return %c0_i32, %c0_i32_0 : i32, i32
  }
  func.func @transform_5(%arg0: i32) -> (i32, i32) {
    %c0_i32 = arith.constant 0 : i32
    %c0_i32_0 = arith.constant 0 : i32
    return %arg0, %c0_i32 : i32, i32
  }
}

</mosaic_0001>

<llo_original>
// kernel: net_forward.3
$region0: #{net_forward.3}
  #allocation0 [shape = 'u32[]', space=smem, size = 0x4, offset = 0x4, fixed_abs, tag = 'smem constant byte address 0x4 - core index']
  #allocation1 [shape = 'u32[144,128]{1,0:T(1,128)}', space=vmem, size = 0x12000, scoped, tag = 'internal scratch']
  %s0 = inlined_call_operand.vmem [shape: bf16[4,288,25], index: 0, kind: input, shape index: {}]
  %s1 = inlined_call_operand.vmem [shape: bf16[25,10], index: 1, kind: input, shape index: {}]
  %s2 = inlined_call_operand.vmem [shape: f32[1,10], index: 2, kind: input, shape index: {}]
  %s3 = inlined_call_operand.vmem [shape: bf16[288,10], index: 3, kind: output, shape index: {}]
  %s4 = sld [smem:[#allocation0]]
  $region22: #{net_forward.3} parent=0
    _
  %s6 = ssub.s32 1, %s4
  %s7 = scalar_select 0, %s6, %s4
  // Predicated region
  $region2: #{net_forward.3} parent=0 // pred_check
    _
  $region3: #{net_forward.3} parent=0 // pred_check_branch
    %9 = sbr.rel (0) target = $region5
  $region4: #{net_forward.3} parent=0 // pred_region
    _
  $region5: #{net_forward.3} parent=0 // pred_fallthru
    _
  // Predicated region
  $region6: #{net_forward.3} parent=0 // pred_check
    _
  $region7: #{net_forward.3} parent=0 // pred_check_branch
    %11 = sbr.rel (0) target = $region9
  $region8: #{net_forward.3} parent=0 // pred_region
    _
  $region9: #{net_forward.3} parent=0 // pred_fallthru
    _
  // Predicated region
  $region10: #{net_forward.3} parent=0 // pred_check
    _
  $region11: #{net_forward.3} parent=0 // pred_check_branch
    %13 = sbr.rel (0) target = $region13
  $region12: #{net_forward.3} parent=0 // pred_region
    _
  $region13: #{net_forward.3} parent=0 // pred_fallthru
    _
  %v15 = vld [vmem:[%s1] sm:$0xf]
  %v16 = vld [vmem:[%s1 + $0x4] sm:$0xf]
  %v17 = vld [vmem:[%s1 + $0x8] sm:$0xf]
  %v18 = vld [vmem:[%s1 + $0xc] sm:$0x1]
  %v19 = vld [vmem:[%s0] sm:$0xf]
  %v20 = vld [vmem:[%s0 + $0x4] sm:$0xf]
  %v21 = vld [vmem:[%s0 + $0x8] sm:$0xf]
  %v22 = vld [vmem:[%s0 + $0xc] sm:$0xf]
  %v23 = vld [vmem:[%s0 + $0x10] sm:$0xf]
  %v24 = vld [vmem:[%s0 + $0x14] sm:$0xf]
  %v25 = vld [vmem:[%s0 + $0x18] sm:$0xf]
  %v26 = vld [vmem:[%s0 + $0x1c] sm:$0xf]
  %v27 = vld [vmem:[%s0 + $0x20] sm:$0xf]
  %v28 = vld [vmem:[%s0 + $0x24] sm:$0xf]
  %v29 = vld [vmem:[%s0 + $0x28] sm:$0xf]
  %v30 = vld [vmem:[%s0 + $0x2c] sm:$0xf]
  %v31 = vld [vmem:[%s0 + $0x30] sm:$0xf]
  %v32 = vld [vmem:[%s0 + $0x34] sm:$0xf]
  %v33 = vld [vmem:[%s0 + $0x38] sm:$0xf]
  %v34 = vld [vmem:[%s0 + $0x3c] sm:$0xf]
  %v35 = vld [vmem:[%s0 + $0x40] sm:$0xf]
  %v36 = vld [vmem:[%s0 + $0x44] sm:$0xf]
  %v37 = vld [vmem:[%s0 + $0x48] sm:$0xf]
  %v38 = vld [vmem:[%s0 + $0x4c] sm:$0xf]
  %v39 = vld [vmem:[%s0 + $0x50] sm:$0xf]
  %v40 = vld [vmem:[%s0 + $0x54] sm:$0xf]
  %v41 = vld [vmem:[%s0 + $0x58] sm:$0xf]
  %v42 = vld [vmem:[%s0 + $0x5c] sm:$0xf]
  %v43 = vld [vmem:[%s0 + $0x60] sm:$0xf]
  %v44 = vld [vmem:[%s0 + $0x64] sm:$0xf]
  %v45 = vld [vmem:[%s0 + $0x68] sm:$0xf]
  %v46 = vld [vmem:[%s0 + $0x6c] sm:$0xf]
  %v47 = vld [vmem:[%s0 + $0x70] sm:$0xf]
  %v48 = vld [vmem:[%s0 + $0x74] sm:$0xf]
  %v49 = vld [vmem:[%s0 + $0x78] sm:$0xf]
  %v50 = vld [vmem:[%s0 + $0x7c] sm:$0xf]
  %v51 = vld [vmem:[%s0 + $0x80] sm:$0xf]
  %v52 = vld [vmem:[%s0 + $0x84] sm:$0xf]
  %v53 = vld [vmem:[%s0 + $0x88] sm:$0xf]
  %v54 = vld [vmem:[%s0 + $0x8c] sm:$0xf]
  %v91 = vunpack.c.l.b16 %v19
  %v92 = vunpack.c.l.b16 %v20
  %v93 = vunpack.c.l.b16 %v21
  %v94 = vunpack.c.l.b16 %v22
  %v95 = vunpack.c.l.b16 %v23
  %v96 = vunpack.c.l.b16 %v24
  %v97 = vunpack.c.l.b16 %v25
  %v98 = vunpack.c.l.b16 %v26
  %v99 = vunpack.c.l.b16 %v27
  %v100 = vunpack.c.l.b16 %v28
  %v101 = vunpack.c.l.b16 %v29
  %v102 = vunpack.c.l.b16 %v30
  %v103 = vunpack.c.l.b16 %v31
  %v104 = vunpack.c.l.b16 %v32
  %v105 = vunpack.c.l.b16 %v33
  %v106 = vunpack.c.l.b16 %v34
  %v107 = vunpack.c.l.b16 %v35
  %v108 = vunpack.c.l.b16 %v36
  %v109 = vunpack.c.l.b16 %v37
  %v110 = vunpack.c.l.b16 %v38
  %v111 = vunpack.c.l.b16 %v39
  %v112 = vunpack.c.l.b16 %v40
  %v113 = vunpack.c.l.b16 %v41
  %v114 = vunpack.c.l.b16 %v42
  %v115 = vunpack.c.l.b16 %v43
  %v116 = vunpack.c.l.b16 %v44
  %v117 = vunpack.c.l.b16 %v45
  %v118 = vunpack.c.l.b16 %v46
  %v119 = vunpack.c.l.b16 %v47
  %v120 = vunpack.c.l.b16 %v48
  %v121 = vunpack.c.l.b16 %v49
  %v122 = vunpack.c.l.b16 %v50
  %v123 = vunpack.c.l.b16 %v51
  %v124 = vunpack.c.l.b16 %v52
  %v125 = vunpack.c.l.b16 %v53
  %v126 = vunpack.c.l.b16 %v54
  %v127 = vpack.c.b16 %v92, %v91
  %v128 = vpack.c.b16 %v94, %v93
  %v129 = vpack.c.b16 %v96, %v95
  %v130 = vpack.c.b16 %v98, %v97
  %v131 = vpack.c.b16 %v100, %v99
  %v132 = vpack.c.b16 %v102, %v101
  %v133 = vpack.c.b16 %v104, %v103
  %v134 = vpack.c.b16 %v106, %v105
  %v135 = vpack.c.b16 %v108, %v107
  %v136 = vpack.c.b16 %v110, %v109
  %v137 = vpack.c.b16 %v112, %v111
  %v138 = vpack.c.b16 %v114, %v113
  %v139 = vpack.c.b16 %v116, %v115
  %v140 = vpack.c.b16 %v118, %v117
  %v141 = vpack.c.b16 %v120, %v119
  %v142 = vpack.c.b16 %v122, %v121
  %v143 = vpack.c.b16 %v124, %v123
  %v144 = vpack.c.b16 %v126, %v125
  %v149 = vunpack.c.l.b16 %v15
  %v150 = vunpack.c.l.b16 %v16
  %v151 = vunpack.c.l.b16 %v17
  %v152 = vunpack.c.l.b16 %v18
  %v153 = vpack.c.b16 %v150, %v149
  %v154 = vpack.c.b16 %v152, %v151
  %vm156 = vcmask 203776
  %v158 = vsel %vm156, %v127, 0
  %v161 = vsel %vm156, %v128, 0
  %v164 = vsel %vm156, %v129, 0
  %v167 = vsel %vm156, %v130, 0
  %v170 = vsel %vm156, %v131, 0
  %v173 = vsel %vm156, %v132, 0
  %v176 = vsel %vm156, %v133, 0
  %v179 = vsel %vm156, %v134, 0
  %v182 = vsel %vm156, %v135, 0
  %v185 = vsel %vm156, %v136, 0
  %v188 = vsel %vm156, %v137, 0
  %v191 = vsel %vm156, %v138, 0
  %v194 = vsel %vm156, %v139, 0
  %v197 = vsel %vm156, %v140, 0
  %v200 = vsel %vm156, %v141, 0
  %v203 = vsel %vm156, %v142, 0
  %v206 = vsel %vm156, %v143, 0
  %v209 = vsel %vm156, %v144, 0
  %vm211 = vcmask 1043456
  %vm212 = vcmask 1044480
  %v213 = vsel %vm211, 4294967295, 65535
  %v214 = vsel %vm212, %v213, 0
  %v216 = vand.u32 %v154, %v214
  %218 = vmatprep.subr.bf16.mxu0 0
  %219 = vmatpush1.bf16.msra.mxu0 %v153
  %220 = vmatprep.subr.bf16.mxu0 0
  %221 = vmatpush1.bf16.msra.mxu0 %v216
  %222 = vmatprep.subr.bf16.mxu0 0
  %223 = vmatpush1.bf16.msra.mxu0 0
  %224 = vmatprep.subr.bf16.mxu0 0
  %225 = vmatpush1.bf16.msra.mxu0 0
  %226 = vmatprep.subr.bf16.mxu0 0
  %227 = vmatpush1.bf16.msra.mxu0 0
  %228 = vmatprep.subr.bf16.mxu0 0
  %229 = vmatpush1.bf16.msra.mxu0 0
  %230 = vmatprep.subr.bf16.mxu0 0
  %231 = vmatpush1.bf16.msra.mxu0 0
  %232 = vmatprep.subr.bf16.mxu0 0
  %233 = vmatpush1.bf16.msra.mxu0 0
  %234 = vmatprep.subr.bf16.mxu0 0
  %235 = vmatpush1.bf16.msra.mxu0 0
  %236 = vmatprep.subr.bf16.mxu0 0
  %237 = vmatpush1.bf16.msra.mxu0 0
  %238 = vmatprep.subr.bf16.mxu0 0
  %239 = vmatpush1.bf16.msra.mxu0 0
  %240 = vmatprep.subr.bf16.mxu0 0
  %241 = vmatpush1.bf16.msra.mxu0 0
  %242 = vmatprep.subr.bf16.mxu0 0
  %243 = vmatpush1.bf16.msra.mxu0 0
  %244 = vmatprep.subr.bf16.mxu0 0
  %245 = vmatpush1.bf16.msra.mxu0 0
  %246 = vmatprep.subr.bf16.mxu0 0
  %247 = vmatpush1.bf16.msra.mxu0 0
  %248 = vmatprep.subr.bf16.mxu0 0
  %249 = vmatpush1.bf16.msra.mxu0 0
  %250 = vmatprep.mubr.bf16.mxu0 0
  %251 = vmatmul.mubr.bf16.gmra.mrb[0].mxu0 %v158
  %v252 = vpop.f32.mrb[0].mxu0
  %v253 = vadd.f32 0.0, %v252
  %v254 = vpop.f32.mrb[0].mxu0
  %v255 = vpop.f32.mrb[0].mxu0
  %v256 = vadd.f32 0.0, %v255
  %v257 = vpop.f32.mrb[0].mxu0
  %258 = vmatprep.mubr.bf16.mxu0 0
  %259 = vmatmul.mubr.bf16.gmra.mrb[0].mxu0 %v161
  %v260 = vpop.f32.mrb[0].mxu0
  %v261 = vadd.f32 0.0, %v260
  %v262 = vpop.f32.mrb[0].mxu0
  %v263 = vpop.f32.mrb[0].mxu0
  %v264 = vadd.f32 0.0, %v263
  %v265 = vpop.f32.mrb[0].mxu0
  %266 = vmatprep.mubr.bf16.mxu0 0
  %267 = vmatmul.mubr.bf16.gmra.mrb[0].mxu0 %v164
  %v268 = vpop.f32.mrb[0].mxu0
  %v269 = vadd.f32 0.0, %v268
  %v270 = vpop.f32.mrb[0].mxu0
  %v271 = vpop.f32.mrb[0].mxu0
  %v272 = vadd.f32 0.0, %v271
  %v273 = vpop.f32.mrb[0].mxu0
  %274 = vmatprep.mubr.bf16.mxu0 0
  %275 = vmatmul.mubr.bf16.gmra.mrb[0].mxu0 %v167
  %v276 = vpop.f32.mrb[0].mxu0
  %v277 = vadd.f32 0.0, %v276
  %v278 = vpop.f32.mrb[0].mxu0
  %v279 = vpop.f32.mrb[0].mxu0
  %v280 = vadd.f32 0.0, %v279
  %v281 = vpop.f32.mrb[0].mxu0
  %282 = vmatprep.mubr.bf16.mxu0 0
  %283 = vmatmul.mubr.bf16.gmra.mrb[0].mxu0 %v170
  %v284 = vpop.f32.mrb[0].mxu0
  %v285 = vadd.f32 0.0, %v284
  %v286 = vpop.f32.mrb[0].mxu0
  %v287 = vpop.f32.mrb[0].mxu0
  %v288 = vadd.f32 0.0, %v287
  %v289 = vpop.f32.mrb[0].mxu0
  %290 = vmatprep.mubr.bf16.mxu0 0
  %291 = vmatmul.mubr.bf16.gmra.mrb[0].mxu0 %v173
  %v292 = vpop.f32.mrb[0].mxu0
  %v293 = vadd.f32 0.0, %v292
  %v294 = vpop.f32.mrb[0].mxu0
  %v295 = vpop.f32.mrb[0].mxu0
  %v296 = vadd.f32 0.0, %v295
  %v297 = vpop.f32.mrb[0].mxu0
  %298 = vmatprep.mubr.bf16.mxu0 0
  %299 = vmatmul.mubr.bf16.gmra.mrb[0].mxu0 %v176
  %v300 = vpop.f32.mrb[0].mxu0
  %v301 = vadd.f32 0.0, %v300
  %v302 = vpop.f32.mrb[0].mxu0
  %v303 = vpop.f32.mrb[0].mxu0
  %v304 = vadd.f32 0.0, %v303
  %v305 = vpop.f32.mrb[0].mxu0
  %306 = vmatprep.mubr.bf16.mxu0 0
  %307 = vmatmul.mubr.bf16.gmra.mrb[0].mxu0 %v179
  %v308 = vpop.f32.mrb[0].mxu0
  %v309 = vadd.f32 0.0, %v308
  %v310 = vpop.f32.mrb[0].mxu0
  %v311 = vpop.f32.mrb[0].mxu0
  %v312 = vadd.f32 0.0, %v311
  %v313 = vpop.f32.mrb[0].mxu0
  %314 = vmatprep.mubr.bf16.mxu0 0
  %315 = vmatmul.mubr.bf16.gmra.mrb[0].mxu0 %v182
  %v316 = vpop.f32.mrb[0].mxu0
  %v317 = vadd.f32 0.0, %v316
  %v318 = vpop.f32.mrb[0].mxu0
  %v319 = vpop.f32.mrb[0].mxu0
  %v320 = vadd.f32 0.0, %v319
  %v321 = vpop.f32.mrb[0].mxu0
  %322 = vmatprep.mubr.bf16.mxu0 0
  %323 = vmatmul.mubr.bf16.gmra.mrb[0].mxu0 %v185
  %v324 = vpop.f32.mrb[0].mxu0
  %v325 = vadd.f32 0.0, %v324
  %v326 = vpop.f32.mrb[0].mxu0
  %v327 = vpop.f32.mrb[0].mxu0
  %v328 = vadd.f32 0.0, %v327
  %v329 = vpop.f32.mrb[0].mxu0
  %330 = vmatprep.mubr.bf16.mxu0 0
  %331 = vmatmul.mubr.bf16.gmra.mrb[0].mxu0 %v188
  %v332 = vpop.f32.mrb[0].mxu0
  %v333 = vadd.f32 0.0, %v332
  %v334 = vpop.f32.mrb[0].mxu0
  %v335 = vpop.f32.mrb[0].mxu0
  %v336 = vadd.f32 0.0, %v335
  %v337 = vpop.f32.mrb[0].mxu0
  %338 = vmatprep.mubr.bf16.mxu0 0
  %339 = vmatmul.mubr.bf16.gmra.mrb[0].mxu0 %v191
  %v340 = vpop.f32.mrb[0].mxu0
  %v341 = vadd.f32 0.0, %v340
  %v342 = vpop.f32.mrb[0].mxu0
  %v343 = vpop.f32.mrb[0].mxu0
  %v344 = vadd.f32 0.0, %v343
  %v345 = vpop.f32.mrb[0].mxu0
  %346 = vmatprep.mubr.bf16.mxu0 0
  %347 = vmatmul.mubr.bf16.gmra.mrb[0].mxu0 %v194
  %v348 = vpop.f32.mrb[0].mxu0
  %v349 = vadd.f32 0.0, %v348
  %v350 = vpop.f32.mrb[0].mxu0
  %v351 = vpop.f32.mrb[0].mxu0
  %v352 = vadd.f32 0.0, %v351
  %v353 = vpop.f32.mrb[0].mxu0
  %354 = vmatprep.mubr.bf16.mxu0 0
  %355 = vmatmul.mubr.bf16.gmra.mrb[0].mxu0 %v197
  %v356 = vpop.f32.mrb[0].mxu0
  %v357 = vadd.f32 0.0, %v356
  %v358 = vpop.f32.mrb[0].mxu0
  %v359 = vpop.f32.mrb[0].mxu0
  %v360 = vadd.f32 0.0, %v359
  %v361 = vpop.f32.mrb[0].mxu0
  %362 = vmatprep.mubr.bf16.mxu0 0
  %363 = vmatmul.mubr.bf16.gmra.mrb[0].mxu0 %v200
  %v364 = vpop.f32.mrb[0].mxu0
  %v365 = vadd.f32 0.0, %v364
  %v366 = vpop.f32.mrb[0].mxu0
  %v367 = vpop.f32.mrb[0].mxu0
  %v368 = vadd.f32 0.0, %v367
  %v369 = vpop.f32.mrb[0].mxu0
  %370 = vmatprep.mubr.bf16.mxu0 0
  %371 = vmatmul.mubr.bf16.gmra.mrb[0].mxu0 %v203
  %v372 = vpop.f32.mrb[0].mxu0
  %v373 = vadd.f32 0.0, %v372
  %v374 = vpop.f32.mrb[0].mxu0
  %v375 = vpop.f32.mrb[0].mxu0
  %v376 = vadd.f32 0.0, %v375
  %v377 = vpop.f32.mrb[0].mxu0
  %378 = vmatprep.mubr.bf16.mxu0 0
  %379 = vmatmul.mubr.bf16.gmra.mrb[0].mxu0 %v206
  %v380 = vpop.f32.mrb[0].mxu0
  %v381 = vadd.f32 0.0, %v380
  %v382 = vpop.f32.mrb[0].mxu0
  %v383 = vpop.f32.mrb[0].mxu0
  %v384 = vadd.f32 0.0, %v383
  %v385 = vpop.f32.mrb[0].mxu0
  %386 = vmatprep.mubr.bf16.mxu0 0
  %387 = vmatmul.mubr.bf16.gmra.mrb[0].mxu0 %v209
  %v388 = vpop.f32.mrb[0].mxu0
  %v389 = vadd.f32 0.0, %v388
  %v390 = vpop.f32.mrb[0].mxu0
  %v391 = vpop.f32.mrb[0].mxu0
  %v392 = vadd.f32 0.0, %v391
  %v393 = vpop.f32.mrb[0].mxu0
  %394 = vdwg.mxu0
  %s395 = scalar_lea.vmem %s0, 144
  %v396 = vld [vmem:[%s395] sm:$0xf]
  %v397 = vld [vmem:[%s395 + $0x4] sm:$0xf]
  %v398 = vld [vmem:[%s395 + $0x8] sm:$0xf]
  %v399 = vld [vmem:[%s395 + $0xc] sm:$0xf]
  %v400 = vld [vmem:[%s395 + $0x10] sm:$0xf]
  %v401 = vld [vmem:[%s395 + $0x14] sm:$0xf]
  %v402 = vld [vmem:[%s395 + $0x18] sm:$0xf]
  %v403 = vld [vmem:[%s395 + $0x1c] sm:$0xf]
  %v404 = vld [vmem:[%s395 + $0x20] sm:$0xf]
  %v405 = vld [vmem:[%s395 + $0x24] sm:$0xf]
  %v406 = vld [vmem:[%s395 + $0x28] sm:$0xf]
  %v407 = vld [vmem:[%s395 + $0x2c] sm:$0xf]
  %v408 = vld [vmem:[%s395 + $0x30] sm:$0xf]
  %v409 = vld [vmem:[%s395 + $0x34] sm:$0xf]
  %v410 = vld [vmem:[%s395 + $0x38] sm:$0xf]
  %v411 = vld [vmem:[%s395 + $0x3c] sm:$0xf]
  %v412 = vld [vmem:[%s395 + $0x40] sm:$0xf]
  %v413 = vld [vmem:[%s395 + $0x44] sm:$0xf]
  %v414 = vld [vmem:[%s395 + $0x48] sm:$0xf]
  %v415 = vld [vmem:[%s395 + $0x4c] sm:$0xf]
  %v416 = vld [vmem:[%s395 + $0x50] sm:$0xf]
  %v417 = vld [vmem:[%s395 + $0x54] sm:$0xf]
  %v418 = vld [vmem:[%s395 + $0x58] sm:$0xf]
  %v419 = vld [vmem:[%s395 + $0x5c] sm:$0xf]
  %v420 = vld [vmem:[%s395 + $0x60] sm:$0xf]
  %v421 = vld [vmem:[%s395 + $0x64] sm:$0xf]
  %v422 = vld [vmem:[%s395 + $0x68] sm:$0xf]
  %v423 = vld [vmem:[%s395 + $0x6c] sm:$0xf]
  %v424 = vld [vmem:[%s395 + $0x70] sm:$0xf]
  %v425 = vld [vmem:[%s395 + $0x74] sm:$0xf]
  %v426 = vld [vmem:[%s395 + $0x78] sm:$0xf]
  %v427 = vld [vmem:[%s395 + $0x7c] sm:$0xf]
  %v428 = vld [vmem:[%s395 + $0x80] sm:$0xf]
  %v429 = vld [vmem:[%s395 + $0x84] sm:$0xf]
  %v430 = vld [vmem:[%s395 + $0x88] sm:$0xf]
  %v431 = vld [vmem:[%s395 + $0x8c] sm:$0xf]
  %v468 = vunpack.c.l.b16 %v396
  %v469 = vunpack.c.l.b16 %v397
  %v470 = vunpack.c.l.b16 %v398
  %v471 = vunpack.c.l.b16 %v399
  %v472 = vunpack.c.l.b16 %v400
  %v473 = vunpack.c.l.b16 %v401
  %v474 = vunpack.c.l.b16 %v402
  %v475 = vunpack.c.l.b16 %v403
  %v476 = vunpack.c.l.b16 %v404
  %v477 = vunpack.c.l.b16 %v405
  %v478 = vunpack.c.l.b16 %v406
  %v479 = vunpack.c.l.b16 %v407
  %v480 = vunpack.c.l.b16 %v408
  %v481 = vunpack.c.l.b16 %v409
  %v482 = vunpack.c.l.b16 %v410
  %v483 = vunpack.c.l.b16 %v411
  %v484 = vunpack.c.l.b16 %v412
  %v485 = vunpack.c.l.b16 %v413
  %v486 = vunpack.c.l.b16 %v414
  %v487 = vunpack.c.l.b16 %v415
  %v488 = vunpack.c.l.b16 %v416
  %v489 = vunpack.c.l.b16 %v417
  %v490 = vunpack.c.l.b16 %v418
  %v491 = vunpack.c.l.b16 %v419
  %v492 = vunpack.c.l.b16 %v420
  %v493 = vunpack.c.l.b16 %v421
  %v494 = vunpack.c.l.b16 %v422
  %v495 = vunpack.c.l.b16 %v423
  %v496 = vunpack.c.l.b16 %v424
  %v497 = vunpack.c.l.b16 %v425
  %v498 = vunpack.c.l.b16 %v426
  %v499 = vunpack.c.l.b16 %v427
  %v500 = vunpack.c.l.b16 %v428
  %v501 = vunpack.c.l.b16 %v429
  %v502 = vunpack.c.l.b16 %v430
  %v503 = vunpack.c.l.b16 %v431
  %v504 = vpack.c.b16 %v469, %v468
  %v505 = vpack.c.b16 %v471, %v470
  %v506 = vpack.c.b16 %v473, %v472
  %v507 = vpack.c.b16 %v475, %v474
  %v508 = vpack.c.b16 %v477, %v476
  %v509 = vpack.c.b16 %v479, %v478
  %v510 = vpack.c.b16 %v481, %v480
  %v511 = vpack.c.b16 %v483, %v482
  %v512 = vpack.c.b16 %v485, %v484
  %v513 = vpack.c.b16 %v487, %v486
  %v514 = vpack.c.b16 %v489, %v488
  %v515 = vpack.c.b16 %v491, %v490
  %v516 = vpack.c.b16 %v493, %v492
  %v517 = vpack.c.b16 %v495, %v494
  %v518 = vpack.c.b16 %v497, %v496
  %v519 = vpack.c.b16 %v499, %v498
  %v520 = vpack.c.b16 %v501, %v500
  %v521 = vpack.c.b16 %v503, %v502
  %v523 = vsel %vm156, %v504, 0
  %v526 = vsel %vm156, %v505, 0
  %v529 = vsel %vm156, %v506, 0
  %v532 = vsel %vm156, %v507, 0
  %v535 = vsel %vm156, %v508, 0
  %v538 = vsel %vm156, %v509, 0
  %v541 = vsel %vm156, %v510, 0
  %v544 = vsel %vm156, %v511, 0
  %v547 = vsel %vm156, %v512, 0
  %v550 = vsel %vm156, %v513, 0
  %v553 = vsel %vm156, %v514, 0
  %v556 = vsel %vm156, %v515, 0
  %v559 = vsel %vm156, %v516, 0
  %v562 = vsel %vm156, %v517, 0
  %v565 = vsel %vm156, %v518, 0
  %v568 = vsel %vm156, %v519, 0
  %v571 = vsel %vm156, %v520, 0
  %v574 = vsel %vm156, %v521, 0
  %576 = vmatprep.subr.bf16.mxu0 0
  %577 = vmatpush1.bf16.msra.mxu0 %v153
  %578 = vmatprep.subr.bf16.mxu0 0
  %579 = vmatpush1.bf16.msra.mxu0 %v216
  %580 = vmatprep.subr.bf16.mxu0 0
  %581 = vmatpush1.bf16.msra.mxu0 0
  %582 = vmatprep.subr.bf16.mxu0 0
  %583 = vmatpush1.bf16.msra.mxu0 0
  %584 = vmatprep.subr.bf16.mxu0 0
  %585 = vmatpush1.bf16.msra.mxu0 0
  %586 = vmatprep.subr.bf16.mxu0 0
  %587 = vmatpush1.bf16.msra.mxu0 0
  %588 = vmatprep.subr.bf16.mxu0 0
  %589 = vmatpush1.bf16.msra.mxu0 0
  %590 = vmatprep.subr.bf16.mxu0 0
  %591 = vmatpush1.bf16.msra.mxu0 0
  %592 = vmatprep.subr.bf16.mxu0 0
  %593 = vmatpush1.bf16.msra.mxu0 0
  %594 = vmatprep.subr.bf16.mxu0 0
  %595 = vmatpush1.bf16.msra.mxu0 0
  %596 = vmatprep.subr.bf16.mxu0 0
  %597 = vmatpush1.bf16.msra.mxu0 0
  %598 = vmatprep.subr.bf16.mxu0 0
  %599 = vmatpush1.bf16.msra.mxu0 0
  %600 = vmatprep.subr.bf16.mxu0 0
  %601 = vmatpush1.bf16.msra.mxu0 0
  %602 = vmatprep.subr.bf16.mxu0 0
  %603 = vmatpush1.bf16.msra.mxu0 0
  %604 = vmatprep.subr.bf16.mxu0 0
  %605 = vmatpush1.bf16.msra.mxu0 0
  %606 = vmatprep.subr.bf16.mxu0 0
  %607 = vmatpush1.bf16.msra.mxu0 0
  %608 = vmatprep.mubr.bf16.mxu0 0
  %609 = vmatmul.mubr.bf16.gmra.mrb[0].mxu0 %v523
  %v610 = vpop.f32.mrb[0].mxu0
  %v611 = vadd.f32 0.0, %v610
  %v612 = vpop.f32.mrb[0].mxu0
  %v613 = vpop.f32.mrb[0].mxu0
  %v614 = vadd.f32 0.0, %v613
  %v615 = vpop.f32.mrb[0].mxu0
  %616 = vmatprep.mubr.bf16.mxu0 0
  %617 = vmatmul.mubr.bf16.gmra.mrb[0].mxu0 %v526
  %v618 = vpop.f32.mrb[0].mxu0
  %v619 = vadd.f32 0.0, %v618
  %v620 = vpop.f32.mrb[0].mxu0
  %v621 = vpop.f32.mrb[0].mxu0
  %v622 = vadd.f32 0.0, %v621
  %v623 = vpop.f32.mrb[0].mxu0
  %624 = vmatprep.mubr.bf16.mxu0 0
  %625 = vmatmul.mubr.bf16.gmra.mrb[0].mxu0 %v529
  %v626 = vpop.f32.mrb[0].mxu0
  %v627 = vadd.f32 0.0, %v626
  %v628 = vpop.f32.mrb[0].mxu0
  %v629 = vpop.f32.mrb[0].mxu0
  %v630 = vadd.f32 0.0, %v629
  %v631 = vpop.f32.mrb[0].mxu0
  %632 = vmatprep.mubr.bf16.mxu0 0
  %633 = vmatmul.mubr.bf16.gmra.mrb[0].mxu0 %v532
  %v634 = vpop.f32.mrb[0].mxu0
  %v635 = vadd.f32 0.0, %v634
  %v636 = vpop.f32.mrb[0].mxu0
  %v637 = vpop.f32.mrb[0].mxu0
  %v638 = vadd.f32 0.0, %v637
  %v639 = vpop.f32.mrb[0].mxu0
  %640 = vmatprep.mubr.bf16.mxu0 0
  %641 = vmatmul.mubr.bf16.gmra.mrb[0].mxu0 %v535
  %v642 = vpop.f32.mrb[0].mxu0
  %v643 = vadd.f32 0.0, %v642
  %v644 = vpop.f32.mrb[0].mxu0
  %v645 = vpop.f32.mrb[0].mxu0
  %v646 = vadd.f32 0.0, %v645
  %v647 = vpop.f32.mrb[0].mxu0
  %648 = vmatprep.mubr.bf16.mxu0 0
  %649 = vmatmul.mubr.bf16.gmra.mrb[0].mxu0 %v538
  %v650 = vpop.f32.mrb[0].mxu0
  %v651 = vadd.f32 0.0, %v650
  %v652 = vpop.f32.mrb[0].mxu0
  %v653 = vpop.f32.mrb[0].mxu0
  %v654 = vadd.f32 0.0, %v653
  %v655 = vpop.f32.mrb[0].mxu0
  %656 = vmatprep.mubr.bf16.mxu0 0
  %657 = vmatmul.mubr.bf16.gmra.mrb[0].mxu0 %v541
  %v658 = vpop.f32.mrb[0].mxu0
  %v659 = vadd.f32 0.0, %v658
  %v660 = vpop.f32.mrb[0].mxu0
  %v661 = vpop.f32.mrb[0].mxu0
  %v662 = vadd.f32 0.0, %v661
  %v663 = vpop.f32.mrb[0].mxu0
  %664 = vmatprep.mubr.bf16.mxu0 0
  %665 = vmatmul.mubr.bf16.gmra.mrb[0].mxu0 %v544
  %v666 = vpop.f32.mrb[0].mxu0
  %v667 = vadd.f32 0.0, %v666
  %v668 = vpop.f32.mrb[0].mxu0
  %v669 = vpop.f32.mrb[0].mxu0
  %v670 = vadd.f32 0.0, %v669
  %v671 = vpop.f32.mrb[0].mxu0
  %672 = vmatprep.mubr.bf16.mxu0 0
  %673 = vmatmul.mubr.bf16.gmra.mrb[0].mxu0 %v547
  %v674 = vpop.f32.mrb[0].mxu0
  %v675 = vadd.f32 0.0, %v674
  %v676 = vpop.f32.mrb[0].mxu0
  %v677 = vpop.f32.mrb[0].mxu0
  %v678 = vadd.f32 0.0, %v677
  %v679 = vpop.f32.mrb[0].mxu0
  %680 = vmatprep.mubr.bf16.mxu0 0
  %681 = vmatmul.mubr.bf16.gmra.mrb[0].mxu0 %v550
  %v682 = vpop.f32.mrb[0].mxu0
  %v683 = vadd.f32 0.0, %v682
  %v684 = vpop.f32.mrb[0].mxu0
  %v685 = vpop.f32.mrb[0].mxu0
  %v686 = vadd.f32 0.0, %v685
  %v687 = vpop.f32.mrb[0].mxu0
  %688 = vmatprep.mubr.bf16.mxu0 0
  %689 = vmatmul.mubr.bf16.gmra.mrb[0].mxu0 %v553
  %v690 = vpop.f32.mrb[0].mxu0
  %v691 = vadd.f32 0.0, %v690
  %v692 = vpop.f32.mrb[0].mxu0
  %v693 = vpop.f32.mrb[0].mxu0
  %v694 = vadd.f32 0.0, %v693
  %v695 = vpop.f32.mrb[0].mxu0
  %696 = vmatprep.mubr.bf16.mxu0 0
  %697 = vmatmul.mubr.bf16.gmra.mrb[0].mxu0 %v556
  %v698 = vpop.f32.mrb[0].mxu0
  %v699 = vadd.f32 0.0, %v698
  %v700 = vpop.f32.mrb[0].mxu0
  %v701 = vpop.f32.mrb[0].mxu0
  %v702 = vadd.f32 0.0, %v701
  %v703 = vpop.f32.mrb[0].mxu0
  %704 = vmatprep.mubr.bf16.mxu0 0
  %705 = vmatmul.mubr.bf16.gmra.mrb[0].mxu0 %v559
  %v706 = vpop.f32.mrb[0].mxu0
  %v707 = vadd.f32 0.0, %v706
  %v708 = vpop.f32.mrb[0].mxu0
  %v709 = vpop.f32.mrb[0].mxu0
  %v710 = vadd.f32 0.0, %v709
  %v711 = vpop.f32.mrb[0].mxu0
  %712 = vmatprep.mubr.bf16.mxu0 0
  %713 = vmatmul.mubr.bf16.gmra.mrb[0].mxu0 %v562
  %v714 = vpop.f32.mrb[0].mxu0
  %v715 = vadd.f32 0.0, %v714
  %v716 = vpop.f32.mrb[0].mxu0
  %v717 = vpop.f32.mrb[0].mxu0
  %v718 = vadd.f32 0.0, %v717
  %v719 = vpop.f32.mrb[0].mxu0
  %720 = vmatprep.mubr.bf16.mxu0 0
  %721 = vmatmul.mubr.bf16.gmra.mrb[0].mxu0 %v565
  %v722 = vpop.f32.mrb[0].mxu0
  %v723 = vadd.f32 0.0, %v722
  %v724 = vpop.f32.mrb[0].mxu0
  %v725 = vpop.f32.mrb[0].mxu0
  %v726 = vadd.f32 0.0, %v725
  %v727 = vpop.f32.mrb[0].mxu0
  %728 = vmatprep.mubr.bf16.mxu0 0
  %729 = vmatmul.mubr.bf16.gmra.mrb[0].mxu0 %v568
  %v730 = vpop.f32.mrb[0].mxu0
  %v731 = vadd.f32 0.0, %v730
  %v732 = vpop.f32.mrb[0].mxu0
  %v733 = vpop.f32.mrb[0].mxu0
  %v734 = vadd.f32 0.0, %v733
  %v735 = vpop.f32.mrb[0].mxu0
  %736 = vmatprep.mubr.bf16.mxu0 0
  %737 = vmatmul.mubr.bf16.gmra.mrb[0].mxu0 %v571
  %v738 = vpop.f32.mrb[0].mxu0
  %v739 = vadd.f32 0.0, %v738
  %v740 = vpop.f32.mrb[0].mxu0
  %v741 = vpop.f32.mrb[0].mxu0
  %v742 = vadd.f32 0.0, %v741
  %v743 = vpop.f32.mrb[0].mxu0
  %744 = vmatprep.mubr.bf16.mxu0 0
  %745 = vmatmul.mubr.bf16.gmra.mrb[0].mxu0 %v574
  %v746 = vpop.f32.mrb[0].mxu0
  %v747 = vadd.f32 0.0, %v746
  %v748 = vpop.f32.mrb[0].mxu0
  %v749 = vpop.f32.mrb[0].mxu0
  %v750 = vadd.f32 0.0, %v749
  %v751 = vpop.f32.mrb[0].mxu0
  %752 = vdwg.mxu0
  %v753 = vmax.f32 %v253, %v611
  %v754 = vmax.f32 %v256, %v614
  %v755 = vmax.f32 %v261, %v619
  %v756 = vmax.f32 %v264, %v622
  %v757 = vmax.f32 %v269, %v627
  %v758 = vmax.f32 %v272, %v630
  %v759 = vmax.f32 %v277, %v635
  %v760 = vmax.f32 %v280, %v638
  %v761 = vmax.f32 %v285, %v643
  %v762 = vmax.f32 %v288, %v646
  %v763 = vmax.f32 %v293, %v651
  %v764 = vmax.f32 %v296, %v654
  %v765 = vmax.f32 %v301, %v659
  %v766 = vmax.f32 %v304, %v662
  %v767 = vmax.f32 %v309, %v667
  %v768 = vmax.f32 %v312, %v670
  %v769 = vmax.f32 %v317, %v675
  %v770 = vmax.f32 %v320, %v678
  %v771 = vmax.f32 %v325, %v683
  %v772 = vmax.f32 %v328, %v686
  %v773 = vmax.f32 %v333, %v691
  %v774 = vmax.f32 %v336, %v694
  %v775 = vmax.f32 %v341, %v699
  %v776 = vmax.f32 %v344, %v702
  %v777 = vmax.f32 %v349, %v707
  %v778 = vmax.f32 %v352, %v710
  %v779 = vmax.f32 %v357, %v715
  %v780 = vmax.f32 %v360, %v718
  %v781 = vmax.f32 %v365, %v723
  %v782 = vmax.f32 %v368, %v726
  %v783 = vmax.f32 %v373, %v731
  %v784 = vmax.f32 %v376, %v734
  %v785 = vmax.f32 %v381, %v739
  %v786 = vmax.f32 %v384, %v742
  %v787 = vmax.f32 %v389, %v747
  %v788 = vmax.f32 %v392, %v750
  %s789 = scalar_lea.vmem %s0, 288
  %v790 = vld [vmem:[%s789] sm:$0xf]
  %v791 = vld [vmem:[%s789 + $0x4] sm:$0xf]
  %v792 = vld [vmem:[%s789 + $0x8] sm:$0xf]
  %v793 = vld [vmem:[%s789 + $0xc] sm:$0xf]
  %v794 = vld [vmem:[%s789 + $0x10] sm:$0xf]
  %v795 = vld [vmem:[%s789 + $0x14] sm:$0xf]
  %v796 = vld [vmem:[%s789 + $0x18] sm:$0xf]
  %v797 = vld [vmem:[%s789 + $0x1c] sm:$0xf]
  %v798 = vld [vmem:[%s789 + $0x20] sm:$0xf]
  %v799 = vld [vmem:[%s789 + $0x24] sm:$0xf]
  %v800 = vld [vmem:[%s789 + $0x28] sm:$0xf]
  %v801 = vld [vmem:[%s789 + $0x2c] sm:$0xf]
  %v802 = vld [vmem:[%s789 + $0x30] sm:$0xf]
  %v803 = vld [vmem:[%s789 + $0x34] sm:$0xf]
  %v804 = vld [vmem:[%s789 + $0x38] sm:$0xf]
  %v805 = vld [vmem:[%s789 + $0x3c] sm:$0xf]
  %v806 = vld [vmem:[%s789 + $0x40] sm:$0xf]
  %v807 = vld [vmem:[%s789 + $0x44] sm:$0xf]
  %v808 = vld [vmem:[%s789 + $0x48] sm:$0xf]
  %v809 = vld [vmem:[%s789 + $0x4c] sm:$0xf]
  %v810 = vld [vmem:[%s789 + $0x50] sm:$0xf]
  %v811 = vld [vmem:[%s789 + $0x54] sm:$0xf]
  %v812 = vld [vmem:[%s789 + $0x58] sm:$0xf]
  %v813 = vld [vmem:[%s789 + $0x5c] sm:$0xf]
  %v814 = vld [vmem:[%s789 + $0x60] sm:$0xf]
  %v815 = vld [vmem:[%s789 + $0x64] sm:$0xf]
  %v816 = vld [vmem:[%s789 + $0x68] sm:$0xf]
  %v817 = vld [vmem:[%s789 + $0x6c] sm:$0xf]
  %v818 = vld [vmem:[%s789 + $0x70] sm:$0xf]
  %v819 = vld [vmem:[%s789 + $0x74] sm:$0xf]
  %v820 = vld [vmem:[%s789 + $0x78] sm:$0xf]
  %v821 = vld [vmem:[%s789 + $0x7c] sm:$0xf]
  %v822 = vld [vmem:[%s789 + $0x80] sm:$0xf]
  %v823 = vld [vmem:[%s789 + $0x84] sm:$0xf]
  %v824 = vld [vmem:[%s789 + $0x88] sm:$0xf]
  %v825 = vld [vmem:[%s789 + $0x8c] sm:$0xf]
  %v862 = vunpack.c.l.b16 %v790
  %v863 = vunpack.c.l.b16 %v791
  %v864 = vunpack.c.l.b16 %v792
  %v865 = vunpack.c.l.b16 %v793
  %v866 = vunpack.c.l.b16 %v794
  %v867 = vunpack.c.l.b16 %v795
  %v868 = vunpack.c.l.b16 %v796
  %v869 = vunpack.c.l.b16 %v797
  %v870 = vunpack.c.l.b16 %v798
  %v871 = vunpack.c.l.b16 %v799
  %v872 = vunpack.c.l.b16 %v800
  %v873 = vunpack.c.l.b16 %v801
  %v874 = vunpack.c.l.b16 %v802
  %v875 = vunpack.c.l.b16 %v803
  %v876 = vunpack.c.l.b16 %v804
  %v877 = vunpack.c.l.b16 %v805
  %v878 = vunpack.c.l.b16 %v806
  %v879 = vunpack.c.l.b16 %v807
  %v880 = vunpack.c.l.b16 %v808
  %v881 = vunpack.c.l.b16 %v809
  %v882 = vunpack.c.l.b16 %v810
  %v883 = vunpack.c.l.b16 %v811
  %v884 = vunpack.c.l.b16 %v812
  %v885 = vunpack.c.l.b16 %v813
  %v886 = vunpack.c.l.b16 %v814
  %v887 = vunpack.c.l.b16 %v815
  %v888 = vunpack.c.l.b16 %v816
  %v889 = vunpack.c.l.b16 %v817
  %v890 = vunpack.c.l.b16 %v818
  %v891 = vunpack.c.l.b16 %v819
  %v892 = vunpack.c.l.b16 %v820
  %v893 = vunpack.c.l.b16 %v821
  %v894 = vunpack.c.l.b16 %v822
  %v895 = vunpack.c.l.b16 %v823
  %v896 = vunpack.c.l.b16 %v824
  %v897 = vunpack.c.l.b16 %v825
  %v898 = vpack.c.b16 %v863, %v862
  %v899 = vpack.c.b16 %v865, %v864
  %v900 = vpack.c.b16 %v867, %v866
  %v901 = vpack.c.b16 %v869, %v868
  %v902 = vpack.c.b16 %v871, %v870
  %v903 = vpack.c.b16 %v873, %v872
  %v904 = vpack.c.b16 %v875, %v874
  %v905 = vpack.c.b16 %v877, %v876
  %v906 = vpack.c.b16 %v879, %v878
  %v907 = vpack.c.b16 %v881, %v880
  %v908 = vpack.c.b16 %v883, %v882
  %v909 = vpack.c.b16 %v885, %v884
  %v910 = vpack.c.b16 %v887, %v886
  %v911 = vpack.c.b16 %v889, %v888
  %v912 = vpack.c.b16 %v891, %v890
  %v913 = vpack.c.b16 %v893, %v892
  %v914 = vpack.c.b16 %v895, %v894
  %v915 = vpack.c.b16 %v897, %v896
  %v917 = vsel %vm156, %v898, 0
  %v920 = vsel %vm156, %v899, 0
  %v923 = vsel %vm156, %v900, 0
  %v926 = vsel %vm156, %v901, 0
  %v929 = vsel %vm156, %v902, 0
  %v932 = vsel %vm156, %v903, 0
  %v935 = vsel %vm156, %v904, 0
  %v938 = vsel %vm156, %v905, 0
  %v941 = vsel %vm156, %v906, 0
  %v944 = vsel %vm156, %v907, 0
  %v947 = vsel %vm156, %v908, 0
  %v950 = vsel %vm156, %v909, 0
  %v953 = vsel %vm156, %v910, 0
  %v956 = vsel %vm156, %v911, 0
  %v959 = vsel %vm156, %v912, 0
  %v962 = vsel %vm156, %v913, 0
  %v965 = vsel %vm156, %v914, 0
  %v968 = vsel %vm156, %v915, 0
  %970 = vmatprep.subr.bf16.mxu0 0
  %971 = vmatpush1.bf16.msra.mxu0 %v153
  %972 = vmatprep.subr.bf16.mxu0 0
  %973 = vmatpush1.bf16.msra.mxu0 %v216
  %974 = vmatprep.subr.bf16.mxu0 0
  %975 = vmatpush1.bf16.msra.mxu0 0
  %976 = vmatprep.subr.bf16.mxu0 0
  %977 = vmatpush1.bf16.msra.mxu0 0
  %978 = vmatprep.subr.bf16.mxu0 0
  %979 = vmatpush1.bf16.msra.mxu0 0
  %980 = vmatprep.subr.bf16.mxu0 0
  %981 = vmatpush1.bf16.msra.mxu0 0
  %982 = vmatprep.subr.bf16.mxu0 0
  %983 = vmatpush1.bf16.msra.mxu0 0
  %984 = vmatprep.subr.bf16.mxu0 0
  %985 = vmatpush1.bf16.msra.mxu0 0
  %986 = vmatprep.subr.bf16.mxu0 0
  %987 = vmatpush1.bf16.msra.mxu0 0
  %988 = vmatprep.subr.bf16.mxu0 0
  %989 = vmatpush1.bf16.msra.mxu0 0
  %990 = vmatprep.subr.bf16.mxu0 0
  %991 = vmatpush1.bf16.msra.mxu0 0
  %992 = vmatprep.subr.bf16.mxu0 0
  %993 = vmatpush1.bf16.msra.mxu0 0
  %994 = vmatprep.subr.bf16.mxu0 0
  %995 = vmatpush1.bf16.msra.mxu0 0
  %996 = vmatprep.subr.bf16.mxu0 0
  %997 = vmatpush1.bf16.msra.mxu0 0
  %998 = vmatprep.subr.bf16.mxu0 0
  %999 = vmatpush1.bf16.msra.mxu0 0
  %1000 = vmatprep.subr.bf16.mxu0 0
  %1001 = vmatpush1.bf16.msra.mxu0 0
  %1002 = vmatprep.mubr.bf16.mxu0 0
  %1003 = vmatmul.mubr.bf16.gmra.mrb[0].mxu0 %v917
  %v1004 = vpop.f32.mrb[0].mxu0
  %v1005 = vadd.f32 0.0, %v1004
  %v1006 = vpop.f32.mrb[0].mxu0
  %v1007 = vpop.f32.mrb[0].mxu0
  %v1008 = vadd.f32 0.0, %v1007
  %v1009 = vpop.f32.mrb[0].mxu0
  %1010 = vmatprep.mubr.bf16.mxu0 0
  %1011 = vmatmul.mubr.bf16.gmra.mrb[0].mxu0 %v920
  %v1012 = vpop.f32.mrb[0].mxu0
  %v1013 = vadd.f32 0.0, %v1012
  %v1014 = vpop.f32.mrb[0].mxu0
  %v1015 = vpop.f32.mrb[0].mxu0
  %v1016 = vadd.f32 0.0, %v1015
  %v1017 = vpop.f32.mrb[0].mxu0
  %1018 = vmatprep.mubr.bf16.mxu0 0
  %1019 = vmatmul.mubr.bf16.gmra.mrb[0].mxu0 %v923
  %v1020 = vpop.f32.mrb[0].mxu0
  %v1021 = vadd.f32 0.0, %v1020
  %v1022 = vpop.f32.mrb[0].mxu0
  %v1023 = vpop.f32.mrb[0].mxu0
  %v1024 = vadd.f32 0.0, %v1023
  %v1025 = vpop.f32.mrb[0].mxu0
  %1026 = vmatprep.mubr.bf16.mxu0 0
  %1027 = vmatmul.mubr.bf16.gmra.mrb[0].mxu0 %v926
  %v1028 = vpop.f32.mrb[0].mxu0
  %v1029 = vadd.f32 0.0, %v1028
  %v1030 = vpop.f32.mrb[0].mxu0
  %v1031 = vpop.f32.mrb[0].mxu0
  %v1032 = vadd.f32 0.0, %v1031
  %v1033 = vpop.f32.mrb[0].mxu0
  %1034 = vmatprep.mubr.bf16.mxu0 0
  %1035 = vmatmul.mubr.bf16.gmra.mrb[0].mxu0 %v929
  %v1036 = vpop.f32.mrb[0].mxu0
  %v1037 = vadd.f32 0.0, %v1036
  %v1038 = vpop.f32.mrb[0].mxu0
  %v1039 = vpop.f32.mrb[0].mxu0
  %v1040 = vadd.f32 0.0, %v1039
  %v1041 = vpop.f32.mrb[0].mxu0
  %1042 = vmatprep.mubr.bf16.mxu0 0
  %1043 = vmatmul.mubr.bf16.gmra.mrb[0].mxu0 %v932
  %v1044 = vpop.f32.mrb[0].mxu0
  %v1045 = vadd.f32 0.0, %v1044
  %v1046 = vpop.f32.mrb[0].mxu0
  %v1047 = vpop.f32.mrb[0].mxu0
  %v1048 = vadd.f32 0.0, %v1047
  %v1049 = vpop.f32.mrb[0].mxu0
  %1050 = vmatprep.mubr.bf16.mxu0 0
  %1051 = vmatmul.mubr.bf16.gmra.mrb[0].mxu0 %v935
  %v1052 = vpop.f32.mrb[0].mxu0
  %v1053 = vadd.f32 0.0, %v1052
  %v1054 = vpop.f32.mrb[0].mxu0
  %v1055 = vpop.f32.mrb[0].mxu0
  %v1056 = vadd.f32 0.0, %v1055
  %v1057 = vpop.f32.mrb[0].mxu0
  %1058 = vmatprep.mubr.bf16.mxu0 0
  %1059 = vmatmul.mubr.bf16.gmra.mrb[0].mxu0 %v938
  %v1060 = vpop.f32.mrb[0].mxu0
  %v1061 = vadd.f32 0.0, %v1060
  %v1062 = vpop.f32.mrb[0].mxu0
  %v1063 = vpop.f32.mrb[0].mxu0
  %v1064 = vadd.f32 0.0, %v1063
  %v1065 = vpop.f32.mrb[0].mxu0
  %1066 = vmatprep.mubr.bf16.mxu0 0
  %1067 = vmatmul.mubr.bf16.gmra.mrb[0].mxu0 %v941
  %v1068 = vpop.f32.mrb[0].mxu0
  %v1069 = vadd.f32 0.0, %v1068
  %v1070 = vpop.f32.mrb[0].mxu0
  %v1071 = vpop.f32.mrb[0].mxu0
  %v1072 = vadd.f32 0.0, %v1071
  %v1073 = vpop.f32.mrb[0].mxu0
  %1074 = vmatprep.mubr.bf16.mxu0 0
  %1075 = vmatmul.mubr.bf16.gmra.mrb[0].mxu0 %v944
  %v1076 = vpop.f32.mrb[0].mxu0
  %v1077 = vadd.f32 0.0, %v1076
  %v1078 = vpop.f32.mrb[0].mxu0
  %v1079 = vpop.f32.mrb[0].mxu0
  %v1080 = vadd.f32 0.0, %v1079
  %v1081 = vpop.f32.mrb[0].mxu0
  %1082 = vmatprep.mubr.bf16.mxu0 0
  %1083 = vmatmul.mubr.bf16.gmra.mrb[0].mxu0 %v947
  %v1084 = vpop.f32.mrb[0].mxu0
  %v1085 = vadd.f32 0.0, %v1084
  %v1086 = vpop.f32.mrb[0].mxu0
  %v1087 = vpop.f32.mrb[0].mxu0
  %v1088 = vadd.f32 0.0, %v1087
  %v1089 = vpop.f32.mrb[0].mxu0
  %1090 = vmatprep.mubr.bf16.mxu0 0
  %1091 = vmatmul.mubr.bf16.gmra.mrb[0].mxu0 %v950
  %v1092 = vpop.f32.mrb[0].mxu0
  %v1093 = vadd.f32 0.0, %v1092
  %v1094 = vpop.f32.mrb[0].mxu0
  %v1095 = vpop.f32.mrb[0].mxu0
  %v1096 = vadd.f32 0.0, %v1095
  %v1097 = vpop.f32.mrb[0].mxu0
  %1098 = vmatprep.mubr.bf16.mxu0 0
  %1099 = vmatmul.mubr.bf16.gmra.mrb[0].mxu0 %v953
  %v1100 = vpop.f32.mrb[0].mxu0
  %v1101 = vadd.f32 0.0, %v1100
  %v1102 = vpop.f32.mrb[0].mxu0
  %v1103 = vpop.f32.mrb[0].mxu0
  %v1104 = vadd.f32 0.0, %v1103
  %v1105 = vpop.f32.mrb[0].mxu0
  %1106 = vmatprep.mubr.bf16.mxu0 0
  %1107 = vmatmul.mubr.bf16.gmra.mrb[0].mxu0 %v956
  %v1108 = vpop.f32.mrb[0].mxu0
  %v1109 = vadd.f32 0.0, %v1108
  %v1110 = vpop.f32.mrb[0].mxu0
  %v1111 = vpop.f32.mrb[0].mxu0
  %v1112 = vadd.f32 0.0, %v1111
  %v1113 = vpop.f32.mrb[0].mxu0
  %1114 = vmatprep.mubr.bf16.mxu0 0
  %1115 = vmatmul.mubr.bf16.gmra.mrb[0].mxu0 %v959
  %v1116 = vpop.f32.mrb[0].mxu0
  %v1117 = vadd.f32 0.0, %v1116
  %v1118 = vpop.f32.mrb[0].mxu0
  %v1119 = vpop.f32.mrb[0].mxu0
  %v1120 = vadd.f32 0.0, %v1119
  %v1121 = vpop.f32.mrb[0].mxu0
  %1122 = vmatprep.mubr.bf16.mxu0 0
  %1123 = vmatmul.mubr.bf16.gmra.mrb[0].mxu0 %v962
  %v1124 = vpop.f32.mrb[0].mxu0
  %v1125 = vadd.f32 0.0, %v1124
  %v1126 = vpop.f32.mrb[0].mxu0
  %v1127 = vpop.f32.mrb[0].mxu0
  %v1128 = vadd.f32 0.0, %v1127
  %v1129 = vpop.f32.mrb[0].mxu0
  %1130 = vmatprep.mubr.bf16.mxu0 0
  %1131 = vmatmul.mubr.bf16.gmra.mrb[0].mxu0 %v965
  %v1132 = vpop.f32.mrb[0].mxu0
  %v1133 = vadd.f32 0.0, %v1132
  %v1134 = vpop.f32.mrb[0].mxu0
  %v1135 = vpop.f32.mrb[0].mxu0
  %v1136 = vadd.f32 0.0, %v1135
  %v1137 = vpop.f32.mrb[0].mxu0
  %1138 = vmatprep.mubr.bf16.mxu0 0
  %1139 = vmatmul.mubr.bf16.gmra.mrb[0].mxu0 %v968
  %v1140 = vpop.f32.mrb[0].mxu0
  %v1141 = vadd.f32 0.0, %v1140
  %v1142 = vpop.f32.mrb[0].mxu0
  %v1143 = vpop.f32.mrb[0].mxu0
  %v1144 = vadd.f32 0.0, %v1143
  %v1145 = vpop.f32.mrb[0].mxu0
  %1146 = vdwg.mxu0
  %v1147 = vmax.f32 %v753, %v1005
  %v1148 = vmax.f32 %v754, %v1008
  %v1149 = vmax.f32 %v755, %v1013
  %v1150 = vmax.f32 %v756, %v1016
  %v1151 = vmax.f32 %v757, %v1021
  %v1152 = vmax.f32 %v758, %v1024
  %v1153 = vmax.f32 %v759, %v1029
  %v1154 = vmax.f32 %v760, %v1032
  %v1155 = vmax.f32 %v761, %v1037
  %v1156 = vmax.f32 %v762, %v1040
  %v1157 = vmax.f32 %v763, %v1045
  %v1158 = vmax.f32 %v764, %v1048
  %v1159 = vmax.f32 %v765, %v1053
  %v1160 = vmax.f32 %v766, %v1056
  %v1161 = vmax.f32 %v767, %v1061
  %v1162 = vmax.f32 %v768, %v1064
  %v1163 = vmax.f32 %v769, %v1069
  %v1164 = vmax.f32 %v770, %v1072
  %v1165 = vmax.f32 %v771, %v1077
  %v1166 = vmax.f32 %v772, %v1080
  %v1167 = vmax.f32 %v773, %v1085
  %v1168 = vmax.f32 %v774, %v1088
  %v1169 = vmax.f32 %v775, %v1093
  %v1170 = vmax.f32 %v776, %v1096
  %v1171 = vmax.f32 %v777, %v1101
  %v1172 = vmax.f32 %v778, %v1104
  %v1173 = vmax.f32 %v779, %v1109
  %v1174 = vmax.f32 %v780, %v1112
  %v1175 = vmax.f32 %v781, %v1117
  %v1176 = vmax.f32 %v782, %v1120
  %v1177 = vmax.f32 %v783, %v1125
  %v1178 = vmax.f32 %v784, %v1128
  %v1179 = vmax.f32 %v785, %v1133
  %v1180 = vmax.f32 %v786, %v1136
  %v1181 = vmax.f32 %v787, %v1141
  %v1182 = vmax.f32 %v788, %v1144
  %s1183 = scalar_lea.vmem %s0, 432
  %v1184 = vld [vmem:[%s1183] sm:$0xf]
  %v1185 = vld [vmem:[%s1183 + $0x4] sm:$0xf]
  %v1186 = vld [vmem:[%s1183 + $0x8] sm:$0xf]
  %v1187 = vld [vmem:[%s1183 + $0xc] sm:$0xf]
  %v1188 = vld [vmem:[%s1183 + $0x10] sm:$0xf]
  %v1189 = vld [vmem:[%s1183 + $0x14] sm:$0xf]
  %v1190 = vld [vmem:[%s1183 + $0x18] sm:$0xf]
  %v1191 = vld [vmem:[%s1183 + $0x1c] sm:$0xf]
  %v1192 = vld [vmem:[%s1183 + $0x20] sm:$0xf]
  %v1193 = vld [vmem:[%s1183 + $0x24] sm:$0xf]
  %v1194 = vld [vmem:[%s1183 + $0x28] sm:$0xf]
  %v1195 = vld [vmem:[%s1183 + $0x2c] sm:$0xf]
  %v1196 = vld [vmem:[%s1183 + $0x30] sm:$0xf]
  %v1197 = vld [vmem:[%s1183 + $0x34] sm:$0xf]
  %v1198 = vld [vmem:[%s1183 + $0x38] sm:$0xf]
  %v1199 = vld [vmem:[%s1183 + $0x3c] sm:$0xf]
  %v1200 = vld [vmem:[%s1183 + $0x40] sm:$0xf]
  %v1201 = vld [vmem:[%s1183 + $0x44] sm:$0xf]
  %v1202 = vld [vmem:[%s1183 + $0x48] sm:$0xf]
  %v1203 = vld [vmem:[%s1183 + $0x4c] sm:$0xf]
  %v1204 = vld [vmem:[%s1183 + $0x50] sm:$0xf]
  %v1205 = vld [vmem:[%s1183 + $0x54] sm:$0xf]
  %v1206 = vld [vmem:[%s1183 + $0x58] sm:$0xf]
  %v1207 = vld [vmem:[%s1183 + $0x5c] sm:$0xf]
  %v1208 = vld [vmem:[%s1183 + $0x60] sm:$0xf]
  %v1209 = vld [vmem:[%s1183 + $0x64] sm:$0xf]
  %v1210 = vld [vmem:[%s1183 + $0x68] sm:$0xf]
  %v1211 = vld [vmem:[%s1183 + $0x6c] sm:$0xf]
  %v1212 = vld [vmem:[%s1183 + $0x70] sm:$0xf]
  %v1213 = vld [vmem:[%s1183 + $0x74] sm:$0xf]
  %v1214 = vld [vmem:[%s1183 + $0x78] sm:$0xf]
  %v1215 = vld [vmem:[%s1183 + $0x7c] sm:$0xf]
  %v1216 = vld [vmem:[%s1183 + $0x80] sm:$0xf]
  %v1217 = vld [vmem:[%s1183 + $0x84] sm:$0xf]
  %v1218 = vld [vmem:[%s1183 + $0x88] sm:$0xf]
  %v1219 = vld [vmem:[%s1183 + $0x8c] sm:$0xf]
  %v1256 = vunpack.c.l.b16 %v1184
  %v1257 = vunpack.c.l.b16 %v1185
  %v1258 = vunpack.c.l.b16 %v1186
  %v1259 = vunpack.c.l.b16 %v1187
  %v1260 = vunpack.c.l.b16 %v1188
  %v1261 = vunpack.c.l.b16 %v1189
  %v1262 = vunpack.c.l.b16 %v1190
  %v1263 = vunpack.c.l.b16 %v1191
  %v1264 = vunpack.c.l.b16 %v1192
  %v1265 = vunpack.c.l.b16 %v1193
  %v1266 = vunpack.c.l.b16 %v1194
  %v1267 = vunpack.c.l.b16 %v1195
  %v1268 = vunpack.c.l.b16 %v1196
  %v1269 = vunpack.c.l.b16 %v1197
  %v1270 = vunpack.c.l.b16 %v1198
  %v1271 = vunpack.c.l.b16 %v1199
  %v1272 = vunpack.c.l.b16 %v1200
  %v1273 = vunpack.c.l.b16 %v1201
  %v1274 = vunpack.c.l.b16 %v1202
  %v1275 = vunpack.c.l.b16 %v1203
  %v1276 = vunpack.c.l.b16 %v1204
  %v1277 = vunpack.c.l.b16 %v1205
  %v1278 = vunpack.c.l.b16 %v1206
  %v1279 = vunpack.c.l.b16 %v1207
  %v1280 = vunpack.c.l.b16 %v1208
  %v1281 = vunpack.c.l.b16 %v1209
  %v1282 = vunpack.c.l.b16 %v1210
  %v1283 = vunpack.c.l.b16 %v1211
  %v1284 = vunpack.c.l.b16 %v1212
  %v1285 = vunpack.c.l.b16 %v1213
  %v1286 = vunpack.c.l.b16 %v1214
  %v1287 = vunpack.c.l.b16 %v1215
  %v1288 = vunpack.c.l.b16 %v1216
  %v1289 = vunpack.c.l.b16 %v1217
  %v1290 = vunpack.c.l.b16 %v1218
  %v1291 = vunpack.c.l.b16 %v1219
  %v1292 = vpack.c.b16 %v1257, %v1256
  %v1293 = vpack.c.b16 %v1259, %v1258
  %v1294 = vpack.c.b16 %v1261, %v1260
  %v1295 = vpack.c.b16 %v1263, %v1262
  %v1296 = vpack.c.b16 %v1265, %v1264
  %v1297 = vpack.c.b16 %v1267, %v1266
  %v1298 = vpack.c.b16 %v1269, %v1268
  %v1299 = vpack.c.b16 %v1271, %v1270
  %v1300 = vpack.c.b16 %v1273, %v1272
  %v1301 = vpack.c.b16 %v1275, %v1274
  %v1302 = vpack.c.b16 %v1277, %v1276
  %v1303 = vpack.c.b16 %v1279, %v1278
  %v1304 = vpack.c.b16 %v1281, %v1280
  %v1305 = vpack.c.b16 %v1283, %v1282
  %v1306 = vpack.c.b16 %v1285, %v1284
  %v1307 = vpack.c.b16 %v1287, %v1286
  %v1308 = vpack.c.b16 %v1289, %v1288
  %v1309 = vpack.c.b16 %v1291, %v1290
  %v1311 = vsel %vm156, %v1292, 0
  %v1314 = vsel %vm156, %v1293, 0
  %v1317 = vsel %vm156, %v1294, 0
  %v1320 = vsel %vm156, %v1295, 0
  %v1323 = vsel %vm156, %v1296, 0
  %v1326 = vsel %vm156, %v1297, 0
  %v1329 = vsel %vm156, %v1298, 0
  %v1332 = vsel %vm156, %v1299, 0
  %v1335 = vsel %vm156, %v1300, 0
  %v1338 = vsel %vm156, %v1301, 0
  %v1341 = vsel %vm156, %v1302, 0
  %v1344 = vsel %vm156, %v1303, 0
  %v1347 = vsel %vm156, %v1304, 0
  %v1350 = vsel %vm156, %v1305, 0
  %v1353 = vsel %vm156, %v1306, 0
  %v1356 = vsel %vm156, %v1307, 0
  %v1359 = vsel %vm156, %v1308, 0
  %v1362 = vsel %vm156, %v1309, 0
  %1364 = vmatprep.subr.bf16.mxu0 0
  %1365 = vmatpush1.bf16.msra.mxu0 %v153
  %1366 = vmatprep.subr.bf16.mxu0 0
  %1367 = vmatpush1.bf16.msra.mxu0 %v216
  %1368 = vmatprep.subr.bf16.mxu0 0
  %1369 = vmatpush1.bf16.msra.mxu0 0
  %1370 = vmatprep.subr.bf16.mxu0 0
  %1371 = vmatpush1.bf16.msra.mxu0 0
  %1372 = vmatprep.subr.bf16.mxu0 0
  %1373 = vmatpush1.bf16.msra.mxu0 0
  %1374 = vmatprep.subr.bf16.mxu0 0
  %1375 = vmatpush1.bf16.msra.mxu0 0
  %1376 = vmatprep.subr.bf16.mxu0 0
  %1377 = vmatpush1.bf16.msra.mxu0 0
  %1378 = vmatprep.subr.bf16.mxu0 0
  %1379 = vmatpush1.bf16.msra.mxu0 0
  %1380 = vmatprep.subr.bf16.mxu0 0
  %1381 = vmatpush1.bf16.msra.mxu0 0
  %1382 = vmatprep.subr.bf16.mxu0 0
  %1383 = vmatpush1.bf16.msra.mxu0 0
  %1384 = vmatprep.subr.bf16.mxu0 0
  %1385 = vmatpush1.bf16.msra.mxu0 0
  %1386 = vmatprep.subr.bf16.mxu0 0
  %1387 = vmatpush1.bf16.msra.mxu0 0
  %1388 = vmatprep.subr.bf16.mxu0 0
  %1389 = vmatpush1.bf16.msra.mxu0 0
  %1390 = vmatprep.subr.bf16.mxu0 0
  %1391 = vmatpush1.bf16.msra.mxu0 0
  %1392 = vmatprep.subr.bf16.mxu0 0
  %1393 = vmatpush1.bf16.msra.mxu0 0
  %1394 = vmatprep.subr.bf16.mxu0 0
  %1395 = vmatpush1.bf16.msra.mxu0 0
  %1396 = vmatprep.mubr.bf16.mxu0 0
  %1397 = vmatmul.mubr.bf16.gmra.mrb[0].mxu0 %v1311
  %v1398 = vpop.f32.mrb[0].mxu0
  %v1399 = vadd.f32 0.0, %v1398
  %v1400 = vpop.f32.mrb[0].mxu0
  %v1401 = vpop.f32.mrb[0].mxu0
  %v1402 = vadd.f32 0.0, %v1401
  %v1403 = vpop.f32.mrb[0].mxu0
  %1404 = vmatprep.mubr.bf16.mxu0 0
  %1405 = vmatmul.mubr.bf16.gmra.mrb[0].mxu0 %v1314
  %v1406 = vpop.f32.mrb[0].mxu0
  %v1407 = vadd.f32 0.0, %v1406
  %v1408 = vpop.f32.mrb[0].mxu0
  %v1409 = vpop.f32.mrb[0].mxu0
  %v1410 = vadd.f32 0.0, %v1409
  %v1411 = vpop.f32.mrb[0].mxu0
  %1412 = vmatprep.mubr.bf16.mxu0 0
  %1413 = vmatmul.mubr.bf16.gmra.mrb[0].mxu0 %v1317
  %v1414 = vpop.f32.mrb[0].mxu0
  %v1415 = vadd.f32 0.0, %v1414
  %v1416 = vpop.f32.mrb[0].mxu0
  %v1417 = vpop.f32.mrb[0].mxu0
  %v1418 = vadd.f32 0.0, %v1417
  %v1419 = vpop.f32.mrb[0].mxu0
  %1420 = vmatprep.mubr.bf16.mxu0 0
  %1421 = vmatmul.mubr.bf16.gmra.mrb[0].mxu0 %v1320
  %v1422 = vpop.f32.mrb[0].mxu0
  %v1423 = vadd.f32 0.0, %v1422
  %v1424 = vpop.f32.mrb[0].mxu0
  %v1425 = vpop.f32.mrb[0].mxu0
  %v1426 = vadd.f32 0.0, %v1425
  %v1427 = vpop.f32.mrb[0].mxu0
  %1428 = vmatprep.mubr.bf16.mxu0 0
  %1429 = vmatmul.mubr.bf16.gmra.mrb[0].mxu0 %v1323
  %v1430 = vpop.f32.mrb[0].mxu0
  %v1431 = vadd.f32 0.0, %v1430
  %v1432 = vpop.f32.mrb[0].mxu0
  %v1433 = vpop.f32.mrb[0].mxu0
  %v1434 = vadd.f32 0.0, %v1433
  %v1435 = vpop.f32.mrb[0].mxu0
  %1436 = vmatprep.mubr.bf16.mxu0 0
  %1437 = vmatmul.mubr.bf16.gmra.mrb[0].mxu0 %v1326
  %v1438 = vpop.f32.mrb[0].mxu0
  %v1439 = vadd.f32 0.0, %v1438
  %v1440 = vpop.f32.mrb[0].mxu0
  %v1441 = vpop.f32.mrb[0].mxu0
  %v1442 = vadd.f32 0.0, %v1441
  %v1443 = vpop.f32.mrb[0].mxu0
  %1444 = vmatprep.mubr.bf16.mxu0 0
  %1445 = vmatmul.mubr.bf16.gmra.mrb[0].mxu0 %v1329
  %v1446 = vpop.f32.mrb[0].mxu0
  %v1447 = vadd.f32 0.0, %v1446
  %v1448 = vpop.f32.mrb[0].mxu0
  %v1449 = vpop.f32.mrb[0].mxu0
  %v1450 = vadd.f32 0.0, %v1449
  %v1451 = vpop.f32.mrb[0].mxu0
  %1452 = vmatprep.mubr.bf16.mxu0 0
  %1453 = vmatmul.mubr.bf16.gmra.mrb[0].mxu0 %v1332
  %v1454 = vpop.f32.mrb[0].mxu0
  %v1455 = vadd.f32 0.0, %v1454
  %v1456 = vpop.f32.mrb[0].mxu0
  %v1457 = vpop.f32.mrb[0].mxu0
  %v1458 = vadd.f32 0.0, %v1457
  %v1459 = vpop.f32.mrb[0].mxu0
  %1460 = vmatprep.mubr.bf16.mxu0 0
  %1461 = vmatmul.mubr.bf16.gmra.mrb[0].mxu0 %v1335
  %v1462 = vpop.f32.mrb[0].mxu0
  %v1463 = vadd.f32 0.0, %v1462
  %v1464 = vpop.f32.mrb[0].mxu0
  %v1465 = vpop.f32.mrb[0].mxu0
  %v1466 = vadd.f32 0.0, %v1465
  %v1467 = vpop.f32.mrb[0].mxu0
  %1468 = vmatprep.mubr.bf16.mxu0 0
  %1469 = vmatmul.mubr.bf16.gmra.mrb[0].mxu0 %v1338
  %v1470 = vpop.f32.mrb[0].mxu0
  %v1471 = vadd.f32 0.0, %v1470
  %v1472 = vpop.f32.mrb[0].mxu0
  %v1473 = vpop.f32.mrb[0].mxu0
  %v1474 = vadd.f32 0.0, %v1473
  %v1475 = vpop.f32.mrb[0].mxu0
  %1476 = vmatprep.mubr.bf16.mxu0 0
  %1477 = vmatmul.mubr.bf16.gmra.mrb[0].mxu0 %v1341
  %v1478 = vpop.f32.mrb[0].mxu0
  %v1479 = vadd.f32 0.0, %v1478
  %v1480 = vpop.f32.mrb[0].mxu0
  %v1481 = vpop.f32.mrb[0].mxu0
  %v1482 = vadd.f32 0.0, %v1481
  %v1483 = vpop.f32.mrb[0].mxu0
  %1484 = vmatprep.mubr.bf16.mxu0 0
  %1485 = vmatmul.mubr.bf16.gmra.mrb[0].mxu0 %v1344
  %v1486 = vpop.f32.mrb[0].mxu0
  %v1487 = vadd.f32 0.0, %v1486
  %v1488 = vpop.f32.mrb[0].mxu0
  %v1489 = vpop.f32.mrb[0].mxu0
  %v1490 = vadd.f32 0.0, %v1489
  %v1491 = vpop.f32.mrb[0].mxu0
  %1492 = vmatprep.mubr.bf16.mxu0 0
  %1493 = vmatmul.mubr.bf16.gmra.mrb[0].mxu0 %v1347
  %v1494 = vpop.f32.mrb[0].mxu0
  %v1495 = vadd.f32 0.0, %v1494
  %v1496 = vpop.f32.mrb[0].mxu0
  %v1497 = vpop.f32.mrb[0].mxu0
  %v1498 = vadd.f32 0.0, %v1497
  %v1499 = vpop.f32.mrb[0].mxu0
  %1500 = vmatprep.mubr.bf16.mxu0 0
  %1501 = vmatmul.mubr.bf16.gmra.mrb[0].mxu0 %v1350
  %v1502 = vpop.f32.mrb[0].mxu0
  %v1503 = vadd.f32 0.0, %v1502
  %v1504 = vpop.f32.mrb[0].mxu0
  %v1505 = vpop.f32.mrb[0].mxu0
  %v1506 = vadd.f32 0.0, %v1505
  %v1507 = vpop.f32.mrb[0].mxu0
  %1508 = vmatprep.mubr.bf16.mxu0 0
  %1509 = vmatmul.mubr.bf16.gmra.mrb[0].mxu0 %v1353
  %v1510 = vpop.f32.mrb[0].mxu0
  %v1511 = vadd.f32 0.0, %v1510
  %v1512 = vpop.f32.mrb[0].mxu0
  %v1513 = vpop.f32.mrb[0].mxu0
  %v1514 = vadd.f32 0.0, %v1513
  %v1515 = vpop.f32.mrb[0].mxu0
  %1516 = vmatprep.mubr.bf16.mxu0 0
  %1517 = vmatmul.mubr.bf16.gmra.mrb[0].mxu0 %v1356
  %v1518 = vpop.f32.mrb[0].mxu0
  %v1519 = vadd.f32 0.0, %v1518
  %v1520 = vpop.f32.mrb[0].mxu0
  %v1521 = vpop.f32.mrb[0].mxu0
  %v1522 = vadd.f32 0.0, %v1521
  %v1523 = vpop.f32.mrb[0].mxu0
  %1524 = vmatprep.mubr.bf16.mxu0 0
  %1525 = vmatmul.mubr.bf16.gmra.mrb[0].mxu0 %v1359
  %v1526 = vpop.f32.mrb[0].mxu0
  %v1527 = vadd.f32 0.0, %v1526
  %v1528 = vpop.f32.mrb[0].mxu0
  %v1529 = vpop.f32.mrb[0].mxu0
  %v1530 = vadd.f32 0.0, %v1529
  %v1531 = vpop.f32.mrb[0].mxu0
  %1532 = vmatprep.mubr.bf16.mxu0 0
  %1533 = vmatmul.mubr.bf16.gmra.mrb[0].mxu0 %v1362
  %v1534 = vpop.f32.mrb[0].mxu0
  %v1535 = vadd.f32 0.0, %v1534
  %v1536 = vpop.f32.mrb[0].mxu0
  %v1537 = vpop.f32.mrb[0].mxu0
  %v1538 = vadd.f32 0.0, %v1537
  %v1539 = vpop.f32.mrb[0].mxu0
  %1540 = vdwg.mxu0
  %v1541 = vmax.f32 %v1147, %v1399
  %v1542 = vmax.f32 %v1148, %v1402
  %v1543 = vmax.f32 %v1149, %v1407
  %v1544 = vmax.f32 %v1150, %v1410
  %v1545 = vmax.f32 %v1151, %v1415
  %v1546 = vmax.f32 %v1152, %v1418
  %v1547 = vmax.f32 %v1153, %v1423
  %v1548 = vmax.f32 %v1154, %v1426
  %v1549 = vmax.f32 %v1155, %v1431
  %v1550 = vmax.f32 %v1156, %v1434
  %v1551 = vmax.f32 %v1157, %v1439
  %v1552 = vmax.f32 %v1158, %v1442
  %v1553 = vmax.f32 %v1159, %v1447
  %v1554 = vmax.f32 %v1160, %v1450
  %v1555 = vmax.f32 %v1161, %v1455
  %v1556 = vmax.f32 %v1162, %v1458
  %v1557 = vmax.f32 %v1163, %v1463
  %v1558 = vmax.f32 %v1164, %v1466
  %v1559 = vmax.f32 %v1165, %v1471
  %v1560 = vmax.f32 %v1166, %v1474
  %v1561 = vmax.f32 %v1167, %v1479
  %v1562 = vmax.f32 %v1168, %v1482
  %v1563 = vmax.f32 %v1169, %v1487
  %v1564 = vmax.f32 %v1170, %v1490
  %v1565 = vmax.f32 %v1171, %v1495
  %v1566 = vmax.f32 %v1172, %v1498
  %v1567 = vmax.f32 %v1173, %v1503
  %v1568 = vmax.f32 %v1174, %v1506
  %v1569 = vmax.f32 %v1175, %v1511
  %v1570 = vmax.f32 %v1176, %v1514
  %v1571 = vmax.f32 %v1177, %v1519
  %v1572 = vmax.f32 %v1178, %v1522
  %v1573 = vmax.f32 %v1179, %v1527
  %v1574 = vmax.f32 %v1180, %v1530
  %v1575 = vmax.f32 %v1181, %v1535
  %v1576 = vmax.f32 %v1182, %v1538
  %v1577 = vld [vmem:[%s2] sm:$0x1]
  %v1579 = vlaneseq
  %v1580 = vshrl.u32 %v1579, 7
  %v1581 = vsub.s32 0, %v1580
  %v1582 = vrot.slane %v1577, %v1581
  %v1584 = vadd.f32 %v1541, %v1582
  %v1585 = vadd.f32 %v1542, %v1582
  %v1586 = vadd.f32 %v1543, %v1582
  %v1587 = vadd.f32 %v1544, %v1582
  %v1588 = vadd.f32 %v1545, %v1582
  %v1589 = vadd.f32 %v1546, %v1582
  %v1590 = vadd.f32 %v1547, %v1582
  %v1591 = vadd.f32 %v1548, %v1582
  %v1592 = vadd.f32 %v1549, %v1582
  %v1593 = vadd.f32 %v1550, %v1582
  %v1594 = vadd.f32 %v1551, %v1582
  %v1595 = vadd.f32 %v1552, %v1582
  %v1596 = vadd.f32 %v1553, %v1582
  %v1597 = vadd.f32 %v1554, %v1582
  %v1598 = vadd.f32 %v1555, %v1582
  %v1599 = vadd.f32 %v1556, %v1582
  %v1600 = vadd.f32 %v1557, %v1582
  %v1601 = vadd.f32 %v1558, %v1582
  %v1602 = vadd.f32 %v1559, %v1582
  %v1603 = vadd.f32 %v1560, %v1582
  %v1604 = vadd.f32 %v1561, %v1582
  %v1605 = vadd.f32 %v1562, %v1582
  %v1606 = vadd.f32 %v1563, %v1582
  %v1607 = vadd.f32 %v1564, %v1582
  %v1608 = vadd.f32 %v1565, %v1582
  %v1609 = vadd.f32 %v1566, %v1582
  %v1610 = vadd.f32 %v1567, %v1582
  %v1611 = vadd.f32 %v1568, %v1582
  %v1612 = vadd.f32 %v1569, %v1582
  %v1613 = vadd.f32 %v1570, %v1582
  %v1614 = vadd.f32 %v1571, %v1582
  %v1615 = vadd.f32 %v1572, %v1582
  %v1616 = vadd.f32 %v1573, %v1582
  %v1617 = vadd.f32 %v1574, %v1582
  %v1618 = vadd.f32 %v1575, %v1582
  %v1619 = vadd.f32 %v1576, %v1582
  %v1620 = vmax.f32 %v1584, 0.0
  %v1621 = vmax.f32 %v1585, 0.0
  %v1622 = vmax.f32 %v1586, 0.0
  %v1623 = vmax.f32 %v1587, 0.0
  %v1624 = vmax.f32 %v1588, 0.0
  %v1625 = vmax.f32 %v1589, 0.0
  %v1626 = vmax.f32 %v1590, 0.0
  %v1627 = vmax.f32 %v1591, 0.0
  %v1628 = vmax.f32 %v1592, 0.0
  %v1629 = vmax.f32 %v1593, 0.0
  %v1630 = vmax.f32 %v1594, 0.0
  %v1631 = vmax.f32 %v1595, 0.0
  %v1632 = vmax.f32 %v1596, 0.0
  %v1633 = vmax.f32 %v1597, 0.0
  %v1634 = vmax.f32 %v1598, 0.0
  %v1635 = vmax.f32 %v1599, 0.0
  %v1636 = vmax.f32 %v1600, 0.0
  %v1637 = vmax.f32 %v1601, 0.0
  %v1638 = vmax.f32 %v1602, 0.0
  %v1639 = vmax.f32 %v1603, 0.0
  %v1640 = vmax.f32 %v1604, 0.0
  %v1641 = vmax.f32 %v1605, 0.0
  %v1642 = vmax.f32 %v1606, 0.0
  %v1643 = vmax.f32 %v1607, 0.0
  %v1644 = vmax.f32 %v1608, 0.0
  %v1645 = vmax.f32 %v1609, 0.0
  %v1646 = vmax.f32 %v1610, 0.0
  %v1647 = vmax.f32 %v1611, 0.0
  %v1648 = vmax.f32 %v1612, 0.0
  %v1649 = vmax.f32 %v1613, 0.0
  %v1650 = vmax.f32 %v1614, 0.0
  %v1651 = vmax.f32 %v1615, 0.0
  %v1652 = vmax.f32 %v1616, 0.0
  %v1653 = vmax.f32 %v1617, 0.0
  %v1654 = vmax.f32 %v1618, 0.0
  %v1655 = vmax.f32 %v1619, 0.0
  %v1656 = vpack.c.bf16 %v1621, %v1620
  %v1657 = vpack.c.bf16 %v1623, %v1622
  %v1658 = vpack.c.bf16 %v1625, %v1624
  %v1659 = vpack.c.bf16 %v1627, %v1626
  %v1660 = vpack.c.bf16 %v1629, %v1628
  %v1661 = vpack.c.bf16 %v1631, %v1630
  %v1662 = vpack.c.bf16 %v1633, %v1632
  %v1663 = vpack.c.bf16 %v1635, %v1634
  %v1664 = vpack.c.bf16 %v1637, %v1636
  %v1665 = vpack.c.bf16 %v1639, %v1638
  %v1666 = vpack.c.bf16 %v1641, %v1640
  %v1667 = vpack.c.bf16 %v1643, %v1642
  %v1668 = vpack.c.bf16 %v1645, %v1644
  %v1669 = vpack.c.bf16 %v1647, %v1646
  %v1670 = vpack.c.bf16 %v1649, %v1648
  %v1671 = vpack.c.bf16 %v1651, %v1650
  %v1672 = vpack.c.bf16 %v1653, %v1652
  %v1673 = vpack.c.bf16 %v1655, %v1654
  %v1692 = vunpack.c.l.b16 %v1656
  %v1693 = vunpack.c.h.b16 %v1656
  %v1694 = vunpack.c.l.b16 %v1657
  %v1695 = vunpack.c.h.b16 %v1657
  %v1696 = vunpack.c.l.b16 %v1658
  %v1697 = vunpack.c.h.b16 %v1658
  %v1698 = vunpack.c.l.b16 %v1659
  %v1699 = vunpack.c.h.b16 %v1659
  %v1700 = vunpack.c.l.b16 %v1660
  %v1701 = vunpack.c.h.b16 %v1660
  %v1702 = vunpack.c.l.b16 %v1661
  %v1703 = vunpack.c.h.b16 %v1661
  %v1704 = vunpack.c.l.b16 %v1662
  %v1705 = vunpack.c.h.b16 %v1662
  %v1706 = vunpack.c.l.b16 %v1663
  %v1707 = vunpack.c.h.b16 %v1663
  %v1708 = vunpack.c.l.b16 %v1664
  %v1709 = vunpack.c.h.b16 %v1664
  %v1710 = vunpack.c.l.b16 %v1665
  %v1711 = vunpack.c.h.b16 %v1665
  %v1712 = vunpack.c.l.b16 %v1666
  %v1713 = vunpack.c.h.b16 %v1666
  %v1714 = vunpack.c.l.b16 %v1667
  %v1715 = vunpack.c.h.b16 %v1667
  %v1716 = vunpack.c.l.b16 %v1668
  %v1717 = vunpack.c.h.b16 %v1668
  %v1718 = vunpack.c.l.b16 %v1669
  %v1719 = vunpack.c.h.b16 %v1669
  %v1720 = vunpack.c.l.b16 %v1670
  %v1721 = vunpack.c.h.b16 %v1670
  %v1722 = vunpack.c.l.b16 %v1671
  %v1723 = vunpack.c.h.b16 %v1671
  %v1724 = vunpack.c.l.b16 %v1672
  %v1725 = vunpack.c.h.b16 %v1672
  %v1726 = vunpack.c.l.b16 %v1673
  %v1727 = vunpack.c.h.b16 %v1673
  %v1728 = vpack.c.b16 %v1692, %v1692
  %v1729 = vpack.c.b16 %v1693, %v1693
  %v1730 = vpack.c.b16 %v1694, %v1694
  %v1731 = vpack.c.b16 %v1695, %v1695
  %v1732 = vpack.c.b16 %v1696, %v1696
  %v1733 = vpack.c.b16 %v1697, %v1697
  %v1734 = vpack.c.b16 %v1698, %v1698
  %v1735 = vpack.c.b16 %v1699, %v1699
  %v1736 = vpack.c.b16 %v1700, %v1700
  %v1737 = vpack.c.b16 %v1701, %v1701
  %v1738 = vpack.c.b16 %v1702, %v1702
  %v1739 = vpack.c.b16 %v1703, %v1703
  %v1740 = vpack.c.b16 %v1704, %v1704
  %v1741 = vpack.c.b16 %v1705, %v1705
  %v1742 = vpack.c.b16 %v1706, %v1706
  %v1743 = vpack.c.b16 %v1707, %v1707
  %v1744 = vpack.c.b16 %v1708, %v1708
  %v1745 = vpack.c.b16 %v1709, %v1709
  %v1746 = vpack.c.b16 %v1710, %v1710
  %v1747 = vpack.c.b16 %v1711, %v1711
  %v1748 = vpack.c.b16 %v1712, %v1712
  %v1749 = vpack.c.b16 %v1713, %v1713
  %v1750 = vpack.c.b16 %v1714, %v1714
  %v1751 = vpack.c.b16 %v1715, %v1715
  %v1752 = vpack.c.b16 %v1716, %v1716
  %v1753 = vpack.c.b16 %v1717, %v1717
  %v1754 = vpack.c.b16 %v1718, %v1718
  %v1755 = vpack.c.b16 %v1719, %v1719
  %v1756 = vpack.c.b16 %v1720, %v1720
  %v1757 = vpack.c.b16 %v1721, %v1721
  %v1758 = vpack.c.b16 %v1722, %v1722
  %v1759 = vpack.c.b16 %v1723, %v1723
  %v1760 = vpack.c.b16 %v1724, %v1724
  %v1761 = vpack.c.b16 %v1725, %v1725
  %v1762 = vpack.c.b16 %v1726, %v1726
  %v1763 = vpack.c.b16 %v1727, %v1727
  %vm1800 = vcmask 76800
  %1801 = vst.msk [vmem:[%s3] sm:$0xf] %vm1800, %v1728
  %1802 = vst.msk [vmem:[%s3 + $0x4] sm:$0xf] %vm1800, %v1729
  %1803 = vst.msk [vmem:[%s3 + $0x8] sm:$0xf] %vm1800, %v1730
  %1804 = vst.msk [vmem:[%s3 + $0xc] sm:$0xf] %vm1800, %v1731
  %1805 = vst.msk [vmem:[%s3 + $0x10] sm:$0xf] %vm1800, %v1732
  %1806 = vst.msk [vmem:[%s3 + $0x14] sm:$0xf] %vm1800, %v1733
  %1807 = vst.msk [vmem:[%s3 + $0x18] sm:$0xf] %vm1800, %v1734
  %1808 = vst.msk [vmem:[%s3 + $0x1c] sm:$0xf] %vm1800, %v1735
  %1809 = vst.msk [vmem:[%s3 + $0x20] sm:$0xf] %vm1800, %v1736
  %1810 = vst.msk [vmem:[%s3 + $0x24] sm:$0xf] %vm1800, %v1737
  %1811 = vst.msk [vmem:[%s3 + $0x28] sm:$0xf] %vm1800, %v1738
  %1812 = vst.msk [vmem:[%s3 + $0x2c] sm:$0xf] %vm1800, %v1739
  %1813 = vst.msk [vmem:[%s3 + $0x30] sm:$0xf] %vm1800, %v1740
  %1814 = vst.msk [vmem:[%s3 + $0x34] sm:$0xf] %vm1800, %v1741
  %1815 = vst.msk [vmem:[%s3 + $0x38] sm:$0xf] %vm1800, %v1742
  %1816 = vst.msk [vmem:[%s3 + $0x3c] sm:$0xf] %vm1800, %v1743
  %1817 = vst.msk [vmem:[%s3 + $0x40] sm:$0xf] %vm1800, %v1744
  %1818 = vst.msk [vmem:[%s3 + $0x44] sm:$0xf] %vm1800, %v1745
  %1819 = vst.msk [vmem:[%s3 + $0x48] sm:$0xf] %vm1800, %v1746
  %1820 = vst.msk [vmem:[%s3 + $0x4c] sm:$0xf] %vm1800, %v1747
  %1821 = vst.msk [vmem:[%s3 + $0x50] sm:$0xf] %vm1800, %v1748
  %1822 = vst.msk [vmem:[%s3 + $0x54] sm:$0xf] %vm1800, %v1749
  %1823 = vst.msk [vmem:[%s3 + $0x58] sm:$0xf] %vm1800, %v1750
  %1824 = vst.msk [vmem:[%s3 + $0x5c] sm:$0xf] %vm1800, %v1751
  %1825 = vst.msk [vmem:[%s3 + $0x60] sm:$0xf] %vm1800, %v1752
  %1826 = vst.msk [vmem:[%s3 + $0x64] sm:$0xf] %vm1800, %v1753
  %1827 = vst.msk [vmem:[%s3 + $0x68] sm:$0xf] %vm1800, %v1754
  %1828 = vst.msk [vmem:[%s3 + $0x6c] sm:$0xf] %vm1800, %v1755
  %1829 = vst.msk [vmem:[%s3 + $0x70] sm:$0xf] %vm1800, %v1756
  %1830 = vst.msk [vmem:[%s3 + $0x74] sm:$0xf] %vm1800, %v1757
  %1831 = vst.msk [vmem:[%s3 + $0x78] sm:$0xf] %vm1800, %v1758
  %1832 = vst.msk [vmem:[%s3 + $0x7c] sm:$0xf] %vm1800, %v1759
  %1833 = vst.msk [vmem:[%s3 + $0x80] sm:$0xf] %vm1800, %v1760
  %1834 = vst.msk [vmem:[%s3 + $0x84] sm:$0xf] %vm1800, %v1761
  %1835 = vst.msk [vmem:[%s3 + $0x88] sm:$0xf] %vm1800, %v1762
  %1836 = vst.msk [vmem:[%s3 + $0x8c] sm:$0xf] %vm1800, %v1763
  // Predicated region
  $region14: #{net_forward.3} parent=0 // pred_check
    _
  $region15: #{net_forward.3} parent=0 // pred_check_branch
    %1838 = sbr.rel (0) target = $region17
  $region16: #{net_forward.3} parent=0 // pred_region
    _
  $region17: #{net_forward.3} parent=0 // pred_fallthru
    _
  // Predicated region
  $region18: #{net_forward.3} parent=0 // pred_check
    _
  $region19: #{net_forward.3} parent=0 // pred_check_branch
    %1840 = sbr.rel (0) target = $region21
  $region20: #{net_forward.3} parent=0 // pred_region
    _
  $region21: #{net_forward.3} parent=0 // pred_fallthru
    _

// kernel: net_forward.4
$region0: #{net_forward.4}
  #allocation0 [shape = 'u32[]', space=smem, size = 0x4, offset = 0x4, fixed_abs, tag = 'smem constant byte address 0x4 - core index']
  #allocation1 [shape = 'u32[144,128]{1,0:T(1,128)}', space=vmem, size = 0x12000, scoped, tag = 'internal scratch']
  %s0 = inlined_call_operand.vmem [shape: bf16[4,32,250], index: 0, kind: input, shape index: {}]
  %s1 = inlined_call_operand.vmem [shape: bf16[250,20], index: 1, kind: input, shape index: {}]
  %s2 = inlined_call_operand.vmem [shape: f32[1,20], index: 2, kind: input, shape index: {}]
  %s3 = inlined_call_operand.vmem [shape: bf16[32,20], index: 3, kind: output, shape index: {}]
  %s4 = sld [smem:[#allocation0]]
  $region22: #{net_forward.4} parent=0
    _
  %s6 = ssub.s32 1, %s4
  %s7 = scalar_select 0, %s6, %s4
  // Predicated region
  $region2: #{net_forward.4} parent=0 // pred_check
    _
  $region3: #{net_forward.4} parent=0 // pred_check_branch
    %9 = sbr.rel (0) target = $region5
  $region4: #{net_forward.4} parent=0 // pred_region
    _
  $region5: #{net_forward.4} parent=0 // pred_fallthru
    _
  // Predicated region
  $region6: #{net_forward.4} parent=0 // pred_check
    _
  $region7: #{net_forward.4} parent=0 // pred_check_branch
    %11 = sbr.rel (0) target = $region9
  $region8: #{net_forward.4} parent=0 // pred_region
    _
  $region9: #{net_forward.4} parent=0 // pred_fallthru
    _
  // Predicated region
  $region10: #{net_forward.4} parent=0 // pred_check
    _
  $region11: #{net_forward.4} parent=0 // pred_check_branch
    %13 = sbr.rel (0) target = $region13
  $region12: #{net_forward.4} parent=0 // pred_region
    _
  $region13: #{net_forward.4} parent=0 // pred_fallthru
    _
  %v15 = vld [vmem:[%s1] sm:$0xf]
  %v16 = vld [vmem:[%s1 + $0x4] sm:$0xf]
  %v17 = vld [vmem:[%s1 + $0x8] sm:$0xf]
  %v18 = vld [vmem:[%s1 + $0xc] sm:$0xf]
  %v19 = vld [vmem:[%s1 + $0x10] sm:$0xf]
  %v20 = vld [vmem:[%s1 + $0x14] sm:$0xf]
  %v21 = vld [vmem:[%s1 + $0x18] sm:$0xf]
  %v22 = vld [vmem:[%s1 + $0x1c] sm:$0xf]
  %v23 = vld [vmem:[%s1 + $0x20] sm:$0xf]
  %v24 = vld [vmem:[%s1 + $0x24] sm:$0xf]
  %v25 = vld [vmem:[%s1 + $0x28] sm:$0xf]
  %v26 = vld [vmem:[%s1 + $0x2c] sm:$0xf]
  %v27 = vld [vmem:[%s1 + $0x30] sm:$0xf]
  %v28 = vld [vmem:[%s1 + $0x34] sm:$0xf]
  %v29 = vld [vmem:[%s1 + $0x38] sm:$0xf]
  %v30 = vld [vmem:[%s1 + $0x3c] sm:$0xf]
  %v31 = vld [vmem:[%s1 + $0x40] sm:$0xf]
  %v32 = vld [vmem:[%s1 + $0x44] sm:$0xf]
  %v33 = vld [vmem:[%s1 + $0x48] sm:$0xf]
  %v34 = vld [vmem:[%s1 + $0x4c] sm:$0xf]
  %v35 = vld [vmem:[%s1 + $0x50] sm:$0xf]
  %v36 = vld [vmem:[%s1 + $0x54] sm:$0xf]
  %v37 = vld [vmem:[%s1 + $0x58] sm:$0xf]
  %v38 = vld [vmem:[%s1 + $0x5c] sm:$0xf]
  %v39 = vld [vmem:[%s1 + $0x60] sm:$0xf]
  %v40 = vld [vmem:[%s1 + $0x64] sm:$0xf]
  %v41 = vld [vmem:[%s1 + $0x68] sm:$0xf]
  %v42 = vld [vmem:[%s1 + $0x6c] sm:$0xf]
  %v43 = vld [vmem:[%s1 + $0x70] sm:$0xf]
  %v44 = vld [vmem:[%s1 + $0x74] sm:$0xf]
  %v45 = vld [vmem:[%s1 + $0x78] sm:$0xf]
  %v46 = vld [vmem:[%s1 + $0x7c] sm:$0x1]
  %v47 = vld [vmem:[%s0] sm:$0xff]
  %v48 = vld [vmem:[%s0 + $0x8] sm:$0xff]
  %v49 = vld [vmem:[%s0 + $0x10] sm:$0xff]
  %v50 = vld [vmem:[%s0 + $0x18] sm:$0xff]
  %v55 = vunpack.c.l.b16 %v47
  %v56 = vunpack.c.h.b16 %v47
  %v57 = vunpack.c.l.b16 %v48
  %v58 = vunpack.c.h.b16 %v48
  %v59 = vunpack.c.l.b16 %v49
  %v60 = vunpack.c.h.b16 %v49
  %v61 = vunpack.c.l.b16 %v50
  %v62 = vunpack.c.h.b16 %v50
  %v63 = vpack.c.b16 %v57, %v55
  %v64 = vpack.c.b16 %v58, %v56
  %v65 = vpack.c.b16 %v61, %v59
  %v66 = vpack.c.b16 %v62, %v60
  %v101 = vunpack.c.l.b16 %v15
  %v102 = vunpack.c.l.b16 %v16
  %v103 = vunpack.c.l.b16 %v17
  %v104 = vunpack.c.l.b16 %v18
  %v105 = vunpack.c.l.b16 %v19
  %v106 = vunpack.c.l.b16 %v20
  %v107 = vunpack.c.l.b16 %v21
  %v108 = vunpack.c.l.b16 %v22
  %v109 = vunpack.c.l.b16 %v23
  %v110 = vunpack.c.l.b16 %v24
  %v111 = vunpack.c.l.b16 %v25
  %v112 = vunpack.c.l.b16 %v26
  %v113 = vunpack.c.l.b16 %v27
  %v114 = vunpack.c.l.b16 %v28
  %v115 = vunpack.c.l.b16 %v29
  %v116 = vunpack.c.l.b16 %v30
  %v117 = vunpack.c.l.b16 %v31
  %v118 = vunpack.c.l.b16 %v32
  %v119 = vunpack.c.l.b16 %v33
  %v120 = vunpack.c.l.b16 %v34
  %v121 = vunpack.c.l.b16 %v35
  %v122 = vunpack.c.l.b16 %v36
  %v123 = vunpack.c.l.b16 %v37
  %v124 = vunpack.c.l.b16 %v38
  %v125 = vunpack.c.l.b16 %v39
  %v126 = vunpack.c.l.b16 %v40
  %v127 = vunpack.c.l.b16 %v41
  %v128 = vunpack.c.l.b16 %v42
  %v129 = vunpack.c.l.b16 %v43
  %v130 = vunpack.c.l.b16 %v44
  %v131 = vunpack.c.l.b16 %v45
  %v132 = vunpack.c.l.b16 %v46
  %v133 = vpack.c.b16 %v102, %v101
  %v134 = vpack.c.b16 %v104, %v103
  %v135 = vpack.c.b16 %v106, %v105
  %v136 = vpack.c.b16 %v108, %v107
  %v137 = vpack.c.b16 %v110, %v109
  %v138 = vpack.c.b16 %v112, %v111
  %v139 = vpack.c.b16 %v114, %v113
  %v140 = vpack.c.b16 %v116, %v115
  %v141 = vpack.c.b16 %v118, %v117
  %v142 = vpack.c.b16 %v120, %v119
  %v143 = vpack.c.b16 %v122, %v121
  %v144 = vpack.c.b16 %v124, %v123
  %v145 = vpack.c.b16 %v126, %v125
  %v146 = vpack.c.b16 %v128, %v127
  %v147 = vpack.c.b16 %v130, %v129
  %v148 = vpack.c.b16 %v132, %v131
  %vm164 = vcmask 998400
  %v166 = vsel %vm164, %v64, 0
  %v169 = vsel %vm164, %v66, 0
  %vm171 = vcmask 1044480
  %v173 = vsel %vm171, %v148, 0
  %175 = vmatprep.subr.bf16.mxu0 0
  %176 = vmatpush1.bf16.msra.mxu0 %v133
  %177 = vmatprep.subr.bf16.mxu0 0
  %178 = vmatpush1.bf16.msra.mxu0 %v134
  %179 = vmatprep.subr.bf16.mxu0 0
  %180 = vmatpush1.bf16.msra.mxu0 %v135
  %181 = vmatprep.subr.bf16.mxu0 0
  %182 = vmatpush1.bf16.msra.mxu0 %v136
  %183 = vmatprep.subr.bf16.mxu0 0
  %184 = vmatpush1.bf16.msra.mxu0 %v137
  %185 = vmatprep.subr.bf16.mxu0 0
  %186 = vmatpush1.bf16.msra.mxu0 %v138
  %187 = vmatprep.subr.bf16.mxu0 0
  %188 = vmatpush1.bf16.msra.mxu0 %v139
  %189 = vmatprep.subr.bf16.mxu0 0
  %190 = vmatpush1.bf16.msra.mxu0 %v140
  %191 = vmatprep.subr.bf16.mxu0 0
  %192 = vmatpush1.bf16.msra.mxu0 %v141
  %193 = vmatprep.subr.bf16.mxu0 0
  %194 = vmatpush1.bf16.msra.mxu0 %v142
  %195 = vmatprep.subr.bf16.mxu0 0
  %196 = vmatpush1.bf16.msra.mxu0 %v143
  %197 = vmatprep.subr.bf16.mxu0 0
  %198 = vmatpush1.bf16.msra.mxu0 %v144
  %199 = vmatprep.subr.bf16.mxu0 0
  %200 = vmatpush1.bf16.msra.mxu0 %v145
  %201 = vmatprep.subr.bf16.mxu0 0
  %202 = vmatpush1.bf16.msra.mxu0 %v146
  %203 = vmatprep.subr.bf16.mxu0 0
  %204 = vmatpush1.bf16.msra.mxu0 %v147
  %205 = vmatprep.subr.bf16.mxu0 0
  %206 = vmatpush1.bf16.msra.mxu0 %v173
  %207 = vmatprep.mubr.bf16.mxu0 %v166
  %208 = vmatmul.mubr.bf16.gmra.mrb[0].mxu0 %v63
  %v209 = vpop.f32.mrb[0].mxu0
  %v210 = vadd.f32 0.0, %v209
  %v211 = vpop.f32.mrb[0].mxu0
  %v212 = vpop.f32.mrb[0].mxu0
  %v213 = vadd.f32 0.0, %v212
  %v214 = vpop.f32.mrb[0].mxu0
  %215 = vmatprep.mubr.bf16.mxu0 %v169
  %216 = vmatmul.mubr.bf16.gmra.mrb[0].mxu0 %v65
  %v217 = vpop.f32.mrb[0].mxu0
  %v218 = vadd.f32 0.0, %v217
  %v219 = vpop.f32.mrb[0].mxu0
  %v220 = vpop.f32.mrb[0].mxu0
  %v221 = vadd.f32 0.0, %v220
  %v222 = vpop.f32.mrb[0].mxu0
  %223 = vdwg.mxu0
  %s224 = scalar_lea.vmem %s0, 32
  %v225 = vld [vmem:[%s224] sm:$0xff]
  %v226 = vld [vmem:[%s224 + $0x8] sm:$0xff]
  %v227 = vld [vmem:[%s224 + $0x10] sm:$0xff]
  %v228 = vld [vmem:[%s224 + $0x18] sm:$0xff]
  %v233 = vunpack.c.l.b16 %v225
  %v234 = vunpack.c.h.b16 %v225
  %v235 = vunpack.c.l.b16 %v226
  %v236 = vunpack.c.h.b16 %v226
  %v237 = vunpack.c.l.b16 %v227
  %v238 = vunpack.c.h.b16 %v227
  %v239 = vunpack.c.l.b16 %v228
  %v240 = vunpack.c.h.b16 %v228
  %v241 = vpack.c.b16 %v235, %v233
  %v242 = vpack.c.b16 %v236, %v234
  %v243 = vpack.c.b16 %v239, %v237
  %v244 = vpack.c.b16 %v240, %v238
  %v248 = vsel %vm164, %v242, 0
  %v251 = vsel %vm164, %v244, 0
  %253 = vmatprep.subr.bf16.mxu0 0
  %254 = vmatpush1.bf16.msra.mxu0 %v133
  %255 = vmatprep.subr.bf16.mxu0 0
  %256 = vmatpush1.bf16.msra.mxu0 %v134
  %257 = vmatprep.subr.bf16.mxu0 0
  %258 = vmatpush1.bf16.msra.mxu0 %v135
  %259 = vmatprep.subr.bf16.mxu0 0
  %260 = vmatpush1.bf16.msra.mxu0 %v136
  %261 = vmatprep.subr.bf16.mxu0 0
  %262 = vmatpush1.bf16.msra.mxu0 %v137
  %263 = vmatprep.subr.bf16.mxu0 0
  %264 = vmatpush1.bf16.msra.mxu0 %v138
  %265 = vmatprep.subr.bf16.mxu0 0
  %266 = vmatpush1.bf16.msra.mxu0 %v139
  %267 = vmatprep.subr.bf16.mxu0 0
  %268 = vmatpush1.bf16.msra.mxu0 %v140
  %269 = vmatprep.subr.bf16.mxu0 0
  %270 = vmatpush1.bf16.msra.mxu0 %v141
  %271 = vmatprep.subr.bf16.mxu0 0
  %272 = vmatpush1.bf16.msra.mxu0 %v142
  %273 = vmatprep.subr.bf16.mxu0 0
  %274 = vmatpush1.bf16.msra.mxu0 %v143
  %275 = vmatprep.subr.bf16.mxu0 0
  %276 = vmatpush1.bf16.msra.mxu0 %v144
  %277 = vmatprep.subr.bf16.mxu0 0
  %278 = vmatpush1.bf16.msra.mxu0 %v145
  %279 = vmatprep.subr.bf16.mxu0 0
  %280 = vmatpush1.bf16.msra.mxu0 %v146
  %281 = vmatprep.subr.bf16.mxu0 0
  %282 = vmatpush1.bf16.msra.mxu0 %v147
  %283 = vmatprep.subr.bf16.mxu0 0
  %284 = vmatpush1.bf16.msra.mxu0 %v173
  %285 = vmatprep.mubr.bf16.mxu0 %v248
  %286 = vmatmul.mubr.bf16.gmra.mrb[0].mxu0 %v241
  %v287 = vpop.f32.mrb[0].mxu0
  %v288 = vadd.f32 0.0, %v287
  %v289 = vpop.f32.mrb[0].mxu0
  %v290 = vpop.f32.mrb[0].mxu0
  %v291 = vadd.f32 0.0, %v290
  %v292 = vpop.f32.mrb[0].mxu0
  %293 = vmatprep.mubr.bf16.mxu0 %v251
  %294 = vmatmul.mubr.bf16.gmra.mrb[0].mxu0 %v243
  %v295 = vpop.f32.mrb[0].mxu0
  %v296 = vadd.f32 0.0, %v295
  %v297 = vpop.f32.mrb[0].mxu0
  %v298 = vpop.f32.mrb[0].mxu0
  %v299 = vadd.f32 0.0, %v298
  %v300 = vpop.f32.mrb[0].mxu0
  %301 = vdwg.mxu0
  %v302 = vmax.f32 %v210, %v288
  %v303 = vmax.f32 %v213, %v291
  %v304 = vmax.f32 %v218, %v296
  %v305 = vmax.f32 %v221, %v299
  %s306 = scalar_lea.vmem %s0, 64
  %v307 = vld [vmem:[%s306] sm:$0xff]
  %v308 = vld [vmem:[%s306 + $0x8] sm:$0xff]
  %v309 = vld [vmem:[%s306 + $0x10] sm:$0xff]
  %v310 = vld [vmem:[%s306 + $0x18] sm:$0xff]
  %v315 = vunpack.c.l.b16 %v307
  %v316 = vunpack.c.h.b16 %v307
  %v317 = vunpack.c.l.b16 %v308
  %v318 = vunpack.c.h.b16 %v308
  %v319 = vunpack.c.l.b16 %v309
  %v320 = vunpack.c.h.b16 %v309
  %v321 = vunpack.c.l.b16 %v310
  %v322 = vunpack.c.h.b16 %v310
  %v323 = vpack.c.b16 %v317, %v315
  %v324 = vpack.c.b16 %v318, %v316
  %v325 = vpack.c.b16 %v321, %v319
  %v326 = vpack.c.b16 %v322, %v320
  %v330 = vsel %vm164, %v324, 0
  %v333 = vsel %vm164, %v326, 0
  %335 = vmatprep.subr.bf16.mxu0 0
  %336 = vmatpush1.bf16.msra.mxu0 %v133
  %337 = vmatprep.subr.bf16.mxu0 0
  %338 = vmatpush1.bf16.msra.mxu0 %v134
  %339 = vmatprep.subr.bf16.mxu0 0
  %340 = vmatpush1.bf16.msra.mxu0 %v135
  %341 = vmatprep.subr.bf16.mxu0 0
  %342 = vmatpush1.bf16.msra.mxu0 %v136
  %343 = vmatprep.subr.bf16.mxu0 0
  %344 = vmatpush1.bf16.msra.mxu0 %v137
  %345 = vmatprep.subr.bf16.mxu0 0
  %346 = vmatpush1.bf16.msra.mxu0 %v138
  %347 = vmatprep.subr.bf16.mxu0 0
  %348 = vmatpush1.bf16.msra.mxu0 %v139
  %349 = vmatprep.subr.bf16.mxu0 0
  %350 = vmatpush1.bf16.msra.mxu0 %v140
  %351 = vmatprep.subr.bf16.mxu0 0
  %352 = vmatpush1.bf16.msra.mxu0 %v141
  %353 = vmatprep.subr.bf16.mxu0 0
  %354 = vmatpush1.bf16.msra.mxu0 %v142
  %355 = vmatprep.subr.bf16.mxu0 0
  %356 = vmatpush1.bf16.msra.mxu0 %v143
  %357 = vmatprep.subr.bf16.mxu0 0
  %358 = vmatpush1.bf16.msra.mxu0 %v144
  %359 = vmatprep.subr.bf16.mxu0 0
  %360 = vmatpush1.bf16.msra.mxu0 %v145
  %361 = vmatprep.subr.bf16.mxu0 0
  %362 = vmatpush1.bf16.msra.mxu0 %v146
  %363 = vmatprep.subr.bf16.mxu0 0
  %364 = vmatpush1.bf16.msra.mxu0 %v147
  %365 = vmatprep.subr.bf16.mxu0 0
  %366 = vmatpush1.bf16.msra.mxu0 %v173
  %367 = vmatprep.mubr.bf16.mxu0 %v330
  %368 = vmatmul.mubr.bf16.gmra.mrb[0].mxu0 %v323
  %v369 = vpop.f32.mrb[0].mxu0
  %v370 = vadd.f32 0.0, %v369
  %v371 = vpop.f32.mrb[0].mxu0
  %v372 = vpop.f32.mrb[0].mxu0
  %v373 = vadd.f32 0.0, %v372
  %v374 = vpop.f32.mrb[0].mxu0
  %375 = vmatprep.mubr.bf16.mxu0 %v333
  %376 = vmatmul.mubr.bf16.gmra.mrb[0].mxu0 %v325
  %v377 = vpop.f32.mrb[0].mxu0
  %v378 = vadd.f32 0.0, %v377
  %v379 = vpop.f32.mrb[0].mxu0
  %v380 = vpop.f32.mrb[0].mxu0
  %v381 = vadd.f32 0.0, %v380
  %v382 = vpop.f32.mrb[0].mxu0
  %383 = vdwg.mxu0
  %v384 = vmax.f32 %v302, %v370
  %v385 = vmax.f32 %v303, %v373
  %v386 = vmax.f32 %v304, %v378
  %v387 = vmax.f32 %v305, %v381
  %s388 = scalar_lea.vmem %s0, 96
  %v389 = vld [vmem:[%s388] sm:$0xff]
  %v390 = vld [vmem:[%s388 + $0x8] sm:$0xff]
  %v391 = vld [vmem:[%s388 + $0x10] sm:$0xff]
  %v392 = vld [vmem:[%s388 + $0x18] sm:$0xff]
  %v397 = vunpack.c.l.b16 %v389
  %v398 = vunpack.c.h.b16 %v389
  %v399 = vunpack.c.l.b16 %v390
  %v400 = vunpack.c.h.b16 %v390
  %v401 = vunpack.c.l.b16 %v391
  %v402 = vunpack.c.h.b16 %v391
  %v403 = vunpack.c.l.b16 %v392
  %v404 = vunpack.c.h.b16 %v392
  %v405 = vpack.c.b16 %v399, %v397
  %v406 = vpack.c.b16 %v400, %v398
  %v407 = vpack.c.b16 %v403, %v401
  %v408 = vpack.c.b16 %v404, %v402
  %v412 = vsel %vm164, %v406, 0
  %v415 = vsel %vm164, %v408, 0
  %417 = vmatprep.subr.bf16.mxu0 0
  %418 = vmatpush1.bf16.msra.mxu0 %v133
  %419 = vmatprep.subr.bf16.mxu0 0
  %420 = vmatpush1.bf16.msra.mxu0 %v134
  %421 = vmatprep.subr.bf16.mxu0 0
  %422 = vmatpush1.bf16.msra.mxu0 %v135
  %423 = vmatprep.subr.bf16.mxu0 0
  %424 = vmatpush1.bf16.msra.mxu0 %v136
  %425 = vmatprep.subr.bf16.mxu0 0
  %426 = vmatpush1.bf16.msra.mxu0 %v137
  %427 = vmatprep.subr.bf16.mxu0 0
  %428 = vmatpush1.bf16.msra.mxu0 %v138
  %429 = vmatprep.subr.bf16.mxu0 0
  %430 = vmatpush1.bf16.msra.mxu0 %v139
  %431 = vmatprep.subr.bf16.mxu0 0
  %432 = vmatpush1.bf16.msra.mxu0 %v140
  %433 = vmatprep.subr.bf16.mxu0 0
  %434 = vmatpush1.bf16.msra.mxu0 %v141
  %435 = vmatprep.subr.bf16.mxu0 0
  %436 = vmatpush1.bf16.msra.mxu0 %v142
  %437 = vmatprep.subr.bf16.mxu0 0
  %438 = vmatpush1.bf16.msra.mxu0 %v143
  %439 = vmatprep.subr.bf16.mxu0 0
  %440 = vmatpush1.bf16.msra.mxu0 %v144
  %441 = vmatprep.subr.bf16.mxu0 0
  %442 = vmatpush1.bf16.msra.mxu0 %v145
  %443 = vmatprep.subr.bf16.mxu0 0
  %444 = vmatpush1.bf16.msra.mxu0 %v146
  %445 = vmatprep.subr.bf16.mxu0 0
  %446 = vmatpush1.bf16.msra.mxu0 %v147
  %447 = vmatprep.subr.bf16.mxu0 0
  %448 = vmatpush1.bf16.msra.mxu0 %v173
  %449 = vmatprep.mubr.bf16.mxu0 %v412
  %450 = vmatmul.mubr.bf16.gmra.mrb[0].mxu0 %v405
  %v451 = vpop.f32.mrb[0].mxu0
  %v452 = vadd.f32 0.0, %v451
  %v453 = vpop.f32.mrb[0].mxu0
  %v454 = vpop.f32.mrb[0].mxu0
  %v455 = vadd.f32 0.0, %v454
  %v456 = vpop.f32.mrb[0].mxu0
  %457 = vmatprep.mubr.bf16.mxu0 %v415
  %458 = vmatmul.mubr.bf16.gmra.mrb[0].mxu0 %v407
  %v459 = vpop.f32.mrb[0].mxu0
  %v460 = vadd.f32 0.0, %v459
  %v461 = vpop.f32.mrb[0].mxu0
  %v462 = vpop.f32.mrb[0].mxu0
  %v463 = vadd.f32 0.0, %v462
  %v464 = vpop.f32.mrb[0].mxu0
  %465 = vdwg.mxu0
  %v466 = vmax.f32 %v384, %v452
  %v467 = vmax.f32 %v385, %v455
  %v468 = vmax.f32 %v386, %v460
  %v469 = vmax.f32 %v387, %v463
  %v470 = vld [vmem:[%s2] sm:$0x1]
  %v472 = vlaneseq
  %v473 = vshrl.u32 %v472, 7
  %v474 = vsub.s32 0, %v473
  %v475 = vrot.slane %v470, %v474
  %v477 = vadd.f32 %v466, %v475
  %v478 = vadd.f32 %v467, %v475
  %v479 = vadd.f32 %v468, %v475
  %v480 = vadd.f32 %v469, %v475
  %v481 = vmax.f32 %v477, 0.0
  %v482 = vmax.f32 %v478, 0.0
  %v483 = vmax.f32 %v479, 0.0
  %v484 = vmax.f32 %v480, 0.0
  %v485 = vpack.c.bf16 %v482, %v481
  %v486 = vpack.c.bf16 %v484, %v483
  %v489 = vunpack.c.l.b16 %v485
  %v490 = vunpack.c.h.b16 %v485
  %v491 = vunpack.c.l.b16 %v486
  %v492 = vunpack.c.h.b16 %v486
  %v493 = vpack.c.b16 %v489, %v489
  %v494 = vpack.c.b16 %v490, %v490
  %v495 = vpack.c.b16 %v491, %v491
  %v496 = vpack.c.b16 %v492, %v492
  %vm501 = vcmask 158720
  %502 = vst.msk [vmem:[%s3] sm:$0xf] %vm501, %v493
  %503 = vst.msk [vmem:[%s3 + $0x4] sm:$0xf] %vm501, %v494
  %504 = vst.msk [vmem:[%s3 + $0x8] sm:$0xf] %vm501, %v495
  %505 = vst.msk [vmem:[%s3 + $0xc] sm:$0xf] %vm501, %v496
  // Predicated region
  $region14: #{net_forward.4} parent=0 // pred_check
    _
  $region15: #{net_forward.4} parent=0 // pred_check_branch
    %507 = sbr.rel (0) target = $region17
  $region16: #{net_forward.4} parent=0 // pred_region
    _
  $region17: #{net_forward.4} parent=0 // pred_fallthru
    _
  // Predicated region
  $region18: #{net_forward.4} parent=0 // pred_check
    _
  $region19: #{net_forward.4} parent=0 // pred_check_branch
    %509 = sbr.rel (0) target = $region21
  $region20: #{net_forward.4} parent=0 // pred_region
    _
  $region21: #{net_forward.4} parent=0 // pred_fallthru
    _

// kernel: net_forward.5
$region0: #{net_forward.5}
  #allocation0 [shape = 'u32[]', space=smem, size = 0x4, offset = 0x4, fixed_abs, tag = 'smem constant byte address 0x4 - core index']
  #allocation1 [shape = 'u32[144,128]{1,0:T(1,128)}', space=vmem, size = 0x12000, scoped, tag = 'internal scratch']
  %s0 = inlined_call_operand.vmem [shape: bf16[2,320], index: 0, kind: input, shape index: {}]
  %s1 = inlined_call_operand.vmem [shape: bf16[320,50], index: 1, kind: input, shape index: {}]
  %s2 = inlined_call_operand.vmem [shape: f32[1,50], index: 2, kind: input, shape index: {}]
  %s3 = inlined_call_operand.vmem [shape: bf16[50,10], index: 3, kind: input, shape index: {}]
  %s4 = inlined_call_operand.vmem [shape: f32[1,10], index: 4, kind: input, shape index: {}]
  %s5 = inlined_call_operand.hbm [shape: f32[2,10], index: 5, kind: output, shape index: {}]
  %s6 = sld [smem:[#allocation0]]
  $region30: #{net_forward.5} parent=0
    _
  %s8 = ssub.s32 1, %s6
  %s9 = scalar_select 0, %s8, %s6
  $region1: #{net_forward.5} parent=0
    #allocation2 [shape = 'u8[1024]{0}', space=vmem, size = 0x400, scoped, tag = 'output window, operand 0, single buffered']
    #allocation3 [shape = 's32[1]{0}', space=sflag, size = 0x4, scoped, tag = 'scoped memory for net_forward.5']
    %10 = vsyncpa [#allocation3], 0
    // Predicated region
    $region2: #{net_forward.5} parent=1 // pred_check
      _
    $region3: #{net_forward.5} parent=1 // pred_check_branch
      %12 = sbr.rel (0) target = $region5
    $region4: #{net_forward.5} parent=1 // pred_region
      _
    $region5: #{net_forward.5} parent=1 // pred_fallthru
      _
    // Predicated region
    $region6: #{net_forward.5} parent=1 // pred_check
      _
    $region7: #{net_forward.5} parent=1 // pred_check_branch
      %14 = sbr.rel (0) target = $region9
    $region8: #{net_forward.5} parent=1 // pred_region
      _
    $region9: #{net_forward.5} parent=1 // pred_fallthru
      _
    // Predicated region
    $region10: #{net_forward.5} parent=1 // pred_check
      _
    $region11: #{net_forward.5} parent=1 // pred_check_branch
      %16 = sbr.rel (0) target = $region13
    $region12: #{net_forward.5} parent=1 // pred_region
      _
    $region13: #{net_forward.5} parent=1 // pred_fallthru
      _
    // Predicated region
    $region14: #{net_forward.5} parent=1 // pred_check
      _
    $region15: #{net_forward.5} parent=1 // pred_check_branch
      %18 = sbr.rel (0) target = $region17
    $region16: #{net_forward.5} parent=1 // pred_region
      _
    $region17: #{net_forward.5} parent=1 // pred_fallthru
      _
    // Predicated region
    $region18: #{net_forward.5} parent=1 // pred_check
      _
    $region19: #{net_forward.5} parent=1 // pred_check_branch
      %20 = sbr.rel (0) target = $region21
    $region20: #{net_forward.5} parent=1 // pred_region
      _
    $region21: #{net_forward.5} parent=1 // pred_fallthru
      _
    %v22 = vld [vmem:[%s0] sm:$0x7]
    %v23 = vld [vmem:[%s1] sm:$0xf]
    %v24 = vld [vmem:[%s1 + $0x4] sm:$0xf]
    %v25 = vld [vmem:[%s1 + $0x8] sm:$0xf]
    %v26 = vld [vmem:[%s1 + $0xc] sm:$0xf]
    %v27 = vld [vmem:[%s1 + $0x10] sm:$0xf]
    %v28 = vld [vmem:[%s1 + $0x14] sm:$0xf]
    %v29 = vld [vmem:[%s1 + $0x18] sm:$0xf]
    %v30 = vld [vmem:[%s1 + $0x1c] sm:$0xf]
    %v31 = vld [vmem:[%s1 + $0x20] sm:$0xf]
    %v32 = vld [vmem:[%s1 + $0x24] sm:$0xf]
    %v33 = vld [vmem:[%s1 + $0x28] sm:$0xf]
    %v34 = vld [vmem:[%s1 + $0x2c] sm:$0xf]
    %v35 = vld [vmem:[%s1 + $0x30] sm:$0xf]
    %v36 = vld [vmem:[%s1 + $0x34] sm:$0xf]
    %v37 = vld [vmem:[%s1 + $0x38] sm:$0xf]
    %v38 = vld [vmem:[%s1 + $0x3c] sm:$0xf]
    %v39 = vld [vmem:[%s1 + $0x40] sm:$0xf]
    %v40 = vld [vmem:[%s1 + $0x44] sm:$0xf]
    %v41 = vld [vmem:[%s1 + $0x48] sm:$0xf]
    %v42 = vld [vmem:[%s1 + $0x4c] sm:$0xf]
    %v43 = vld [vmem:[%s1 + $0x50] sm:$0xf]
    %v44 = vld [vmem:[%s1 + $0x54] sm:$0xf]
    %v45 = vld [vmem:[%s1 + $0x58] sm:$0xf]
    %v46 = vld [vmem:[%s1 + $0x5c] sm:$0xf]
    %v47 = vld [vmem:[%s1 + $0x60] sm:$0xf]
    %v48 = vld [vmem:[%s1 + $0x64] sm:$0xf]
    %v49 = vld [vmem:[%s1 + $0x68] sm:$0xf]
    %v50 = vld [vmem:[%s1 + $0x6c] sm:$0xf]
    %v51 = vld [vmem:[%s1 + $0x70] sm:$0xf]
    %v52 = vld [vmem:[%s1 + $0x74] sm:$0xf]
    %v53 = vld [vmem:[%s1 + $0x78] sm:$0xf]
    %v54 = vld [vmem:[%s1 + $0x7c] sm:$0xf]
    %v55 = vld [vmem:[%s1 + $0x80] sm:$0xf]
    %v56 = vld [vmem:[%s1 + $0x84] sm:$0xf]
    %v57 = vld [vmem:[%s1 + $0x88] sm:$0xf]
    %v58 = vld [vmem:[%s1 + $0x8c] sm:$0xf]
    %v59 = vld [vmem:[%s1 + $0x90] sm:$0xf]
    %v60 = vld [vmem:[%s1 + $0x94] sm:$0xf]
    %v61 = vld [vmem:[%s1 + $0x98] sm:$0xf]
    %v62 = vld [vmem:[%s1 + $0x9c] sm:$0xf]
    %v63 = vld [vmem:[%s2] sm:$0x1]
    %v65 = vlaneseq
    %v66 = vshrl.u32 %v65, 7
    %v67 = vsub.s32 0, %v66
    %v68 = vrot.slane %v63, %v67
    %v72 = vunpack.c.l.s4 1966171168
    %v73 = vunpack.c.0.s8 %v72
    %v74 = vlaneseq
    %v75 = vshrl.u32 %v74, 7
    %v76 = vsub.s32 %v73, %v75
    %v77 = vrot.slane %v22, %v76
    %v78 = vcombine.high %v77, %v77
    %v80 = vunpack.c.l.s4 1966171168
    %v81 = vunpack.c.0.s8 %v80
    %v82 = vlaneseq
    %v83 = vshrl.u32 %v82, 7
    %v84 = vsub.s32 %v81, %v83
    %v85 = vrot.slane %v77, %v84
    %v87 = vunpack.c.l.s4 1966171168
    %v88 = vunpack.c.0.s8 %v87
    %v89 = vlaneseq
    %v90 = vshrl.u32 %v89, 7
    %v91 = vsub.s32 %v88, %v90
    %v92 = vrot.slane %v78, %v91
    %v93 = vcombine.high %v85, %v85
    %v136 = vunpack.c.l.b16 %v23
    %v137 = vunpack.c.l.b16 %v24
    %v138 = vunpack.c.l.b16 %v25
    %v139 = vunpack.c.l.b16 %v26
    %v140 = vunpack.c.l.b16 %v27
    %v141 = vunpack.c.l.b16 %v28
    %v142 = vunpack.c.l.b16 %v29
    %v143 = vunpack.c.l.b16 %v30
    %v144 = vunpack.c.l.b16 %v31
    %v145 = vunpack.c.l.b16 %v32
    %v146 = vunpack.c.l.b16 %v33
    %v147 = vunpack.c.l.b16 %v34
    %v148 = vunpack.c.l.b16 %v35
    %v149 = vunpack.c.l.b16 %v36
    %v150 = vunpack.c.l.b16 %v37
    %v151 = vunpack.c.l.b16 %v38
    %v152 = vunpack.c.l.b16 %v39
    %v153 = vunpack.c.l.b16 %v40
    %v154 = vunpack.c.l.b16 %v41
    %v155 = vunpack.c.l.b16 %v42
    %v156 = vunpack.c.l.b16 %v43
    %v157 = vunpack.c.l.b16 %v44
    %v158 = vunpack.c.l.b16 %v45
    %v159 = vunpack.c.l.b16 %v46
    %v160 = vunpack.c.l.b16 %v47
    %v161 = vunpack.c.l.b16 %v48
    %v162 = vunpack.c.l.b16 %v49
    %v163 = vunpack.c.l.b16 %v50
    %v164 = vunpack.c.l.b16 %v51
    %v165 = vunpack.c.l.b16 %v52
    %v166 = vunpack.c.l.b16 %v53
    %v167 = vunpack.c.l.b16 %v54
    %v168 = vunpack.c.l.b16 %v55
    %v169 = vunpack.c.l.b16 %v56
    %v170 = vunpack.c.l.b16 %v57
    %v171 = vunpack.c.l.b16 %v58
    %v172 = vunpack.c.l.b16 %v59
    %v173 = vunpack.c.l.b16 %v60
    %v174 = vunpack.c.l.b16 %v61
    %v175 = vunpack.c.l.b16 %v62
    %v176 = vpack.c.b16 %v137, %v136
    %v177 = vpack.c.b16 %v139, %v138
    %v178 = vpack.c.b16 %v141, %v140
    %v179 = vpack.c.b16 %v143, %v142
    %v180 = vpack.c.b16 %v145, %v144
    %v181 = vpack.c.b16 %v147, %v146
    %v182 = vpack.c.b16 %v149, %v148
    %v183 = vpack.c.b16 %v151, %v150
    %v184 = vpack.c.b16 %v153, %v152
    %v185 = vpack.c.b16 %v155, %v154
    %v186 = vpack.c.b16 %v157, %v156
    %v187 = vpack.c.b16 %v159, %v158
    %v188 = vpack.c.b16 %v161, %v160
    %v189 = vpack.c.b16 %v163, %v162
    %v190 = vpack.c.b16 %v165, %v164
    %v191 = vpack.c.b16 %v167, %v166
    %v192 = vpack.c.b16 %v169, %v168
    %v193 = vpack.c.b16 %v171, %v170
    %v194 = vpack.c.b16 %v173, %v172
    %v195 = vpack.c.b16 %v175, %v174
    %vm216 = vcmask 523264
    %v218 = vsel %vm216, %v93, 0
    %220 = vmatprep.subr.bf16.mxu0 0
    %221 = vmatpush1.bf16.msra.mxu0 %v176
    %222 = vmatprep.subr.bf16.mxu0 0
    %223 = vmatpush1.bf16.msra.mxu0 %v177
    %224 = vmatprep.subr.bf16.mxu0 0
    %225 = vmatpush1.bf16.msra.mxu0 %v178
    %226 = vmatprep.subr.bf16.mxu0 0
    %227 = vmatpush1.bf16.msra.mxu0 %v179
    %228 = vmatprep.subr.bf16.mxu0 0
    %229 = vmatpush1.bf16.msra.mxu0 %v180
    %230 = vmatprep.subr.bf16.mxu0 0
    %231 = vmatpush1.bf16.msra.mxu0 %v181
    %232 = vmatprep.subr.bf16.mxu0 0
    %233 = vmatpush1.bf16.msra.mxu0 %v182
    %234 = vmatprep.subr.bf16.mxu0 0
    %235 = vmatpush1.bf16.msra.mxu0 %v183
    %236 = vmatprep.subr.bf16.mxu0 0
    %237 = vmatpush1.bf16.msra.mxu0 %v184
    %238 = vmatprep.subr.bf16.mxu0 0
    %239 = vmatpush1.bf16.msra.mxu0 %v185
    %240 = vmatprep.subr.bf16.mxu0 0
    %241 = vmatpush1.bf16.msra.mxu0 %v186
    %242 = vmatprep.subr.bf16.mxu0 0
    %243 = vmatpush1.bf16.msra.mxu0 %v187
    %244 = vmatprep.subr.bf16.mxu0 0
    %245 = vmatpush1.bf16.msra.mxu0 %v188
    %246 = vmatprep.subr.bf16.mxu0 0
    %247 = vmatpush1.bf16.msra.mxu0 %v189
    %248 = vmatprep.subr.bf16.mxu0 0
    %249 = vmatpush1.bf16.msra.mxu0 %v190
    %250 = vmatprep.subr.bf16.mxu0 0
    %251 = vmatpush1.bf16.msra.mxu0 %v191
    %252 = vmatprep.mubr.bf16.mxu0 %v92
    %253 = vmatmul.mubr.bf16.gmra.mrb[0].mxu0 %v85
    %v254 = vpop.f32.mrb[0].mxu0
    %v255 = vadd.f32 %v68, %v254
    %v256 = vpop.f32.mrb[0].mxu0
    %v257 = vpop.f32.mrb[0].mxu0
    %v258 = vpop.f32.mrb[0].mxu0
    %259 = vdwg.mxu0
    %260 = vmatprep.subr.bf16.mxu0 0
    %261 = vmatpush1.bf16.msra.mxu0 %v192
    %262 = vmatprep.subr.bf16.mxu0 0
    %263 = vmatpush1.bf16.msra.mxu0 %v193
    %264 = vmatprep.subr.bf16.mxu0 0
    %265 = vmatpush1.bf16.msra.mxu0 %v194
    %266 = vmatprep.subr.bf16.mxu0 0
    %267 = vmatpush1.bf16.msra.mxu0 %v195
    %268 = vmatprep.subr.bf16.mxu0 0
    %269 = vmatpush1.bf16.msra.mxu0 0
    %270 = vmatprep.subr.bf16.mxu0 0
    %271 = vmatpush1.bf16.msra.mxu0 0
    %272 = vmatprep.subr.bf16.mxu0 0
    %273 = vmatpush1.bf16.msra.mxu0 0
    %274 = vmatprep.subr.bf16.mxu0 0
    %275 = vmatpush1.bf16.msra.mxu0 0
    %276 = vmatprep.subr.bf16.mxu0 0
    %277 = vmatpush1.bf16.msra.mxu0 0
    %278 = vmatprep.subr.bf16.mxu0 0
    %279 = vmatpush1.bf16.msra.mxu0 0
    %280 = vmatprep.subr.bf16.mxu0 0
    %281 = vmatpush1.bf16.msra.mxu0 0
    %282 = vmatprep.subr.bf16.mxu0 0
    %283 = vmatpush1.bf16.msra.mxu0 0
    %284 = vmatprep.subr.bf16.mxu0 0
    %285 = vmatpush1.bf16.msra.mxu0 0
    %286 = vmatprep.subr.bf16.mxu0 0
    %287 = vmatpush1.bf16.msra.mxu0 0
    %288 = vmatprep.subr.bf16.mxu0 0
    %289 = vmatpush1.bf16.msra.mxu0 0
    %290 = vmatprep.subr.bf16.mxu0 0
    %291 = vmatpush1.bf16.msra.mxu0 0
    %292 = vmatprep.mubr.bf16.mxu0 0
    %293 = vmatmul.mubr.bf16.gmra.mrb[0].mxu0 %v218
    %v294 = vpop.f32.mrb[0].mxu0
    %v295 = vadd.f32 %v255, %v294
    %v296 = vpop.f32.mrb[0].mxu0
    %v297 = vpop.f32.mrb[0].mxu0
    %v298 = vpop.f32.mrb[0].mxu0
    %299 = vdwg.mxu0
    %v300 = vmax.f32 %v295, 0.0
    %v301 = vpack.c.bf16 %v300, %v300
    %v302 = vld [vmem:[%s3] sm:$0xf]
    %v303 = vld [vmem:[%s3 + $0x4] sm:$0xf]
    %v304 = vld [vmem:[%s3 + $0x8] sm:$0xf]
    %v305 = vld [vmem:[%s3 + $0xc] sm:$0xf]
    %v306 = vld [vmem:[%s3 + $0x10] sm:$0xf]
    %v307 = vld [vmem:[%s3 + $0x14] sm:$0xf]
    %v308 = vld [vmem:[%s3 + $0x18] sm:$0x1]
    %v309 = vld [vmem:[%s4] sm:$0x1]
    %v311 = vlaneseq
    %v312 = vshrl.u32 %v311, 7
    %v313 = vsub.s32 0, %v312
    %v314 = vrot.slane %v309, %v313
    %v323 = vunpack.c.l.b16 %v302
    %v324 = vunpack.c.l.b16 %v303
    %v325 = vunpack.c.l.b16 %v304
    %v326 = vunpack.c.l.b16 %v305
    %v327 = vunpack.c.l.b16 %v306
    %v328 = vunpack.c.l.b16 %v307
    %v329 = vunpack.c.l.b16 %v308
    %v330 = vpack.c.b16 %v324, %v323
    %v331 = vpack.c.b16 %v326, %v325
    %v332 = vpack.c.b16 %v328, %v327
    %v333 = vpack.c.b16 %v329, %v329
    %vm337 = vcmask 408576
    %v339 = vsel %vm337, %v301, 0
    %vm341 = vcmask 1040384
    %v343 = vsel %vm341, %v333, 0
    %345 = vmatprep.subr.bf16.mxu0 0
    %346 = vmatpush1.bf16.msra.mxu0 %v330
    %347 = vmatprep.subr.bf16.mxu0 0
    %348 = vmatpush1.bf16.msra.mxu0 %v331
    %349 = vmatprep.subr.bf16.mxu0 0
    %350 = vmatpush1.bf16.msra.mxu0 %v332
    %351 = vmatprep.subr.bf16.mxu0 0
    %352 = vmatpush1.bf16.msra.mxu0 %v343
    %353 = vmatprep.subr.bf16.mxu0 0
    %354 = vmatpush1.bf16.msra.mxu0 0
    %355 = vmatprep.subr.bf16.mxu0 0
    %356 = vmatpush1.bf16.msra.mxu0 0
    %357 = vmatprep.subr.bf16.mxu0 0
    %358 = vmatpush1.bf16.msra.mxu0 0
    %359 = vmatprep.subr.bf16.mxu0 0
    %360 = vmatpush1.bf16.msra.mxu0 0
    %361 = vmatprep.subr.bf16.mxu0 0
    %362 = vmatpush1.bf16.msra.mxu0 0
    %363 = vmatprep.subr.bf16.mxu0 0
    %364 = vmatpush1.bf16.msra.mxu0 0
    %365 = vmatprep.subr.bf16.mxu0 0
    %366 = vmatpush1.bf16.msra.mxu0 0
    %367 = vmatprep.subr.bf16.mxu0 0
    %368 = vmatpush1.bf16.msra.mxu0 0
    %369 = vmatprep.subr.bf16.mxu0 0
    %370 = vmatpush1.bf16.msra.mxu0 0
    %371 = vmatprep.subr.bf16.mxu0 0
    %372 = vmatpush1.bf16.msra.mxu0 0
    %373 = vmatprep.subr.bf16.mxu0 0
    %374 = vmatpush1.bf16.msra.mxu0 0
    %375 = vmatprep.subr.bf16.mxu0 0
    %376 = vmatpush1.bf16.msra.mxu0 0
    %377 = vmatprep.mubr.bf16.mxu0 0
    %378 = vmatmul.mubr.bf16.gmra.mrb[0].mxu0 %v339
    %v379 = vpop.f32.mrb[0].mxu0
    %v380 = vadd.f32 %v314, %v379
    %v381 = vpop.f32.mrb[0].mxu0
    %v382 = vpop.f32.mrb[0].mxu0
    %v383 = vpop.f32.mrb[0].mxu0
    %384 = vdwg.mxu0
    %vm385 = vcmask 74752
    %v386 = vsel %vm385, %v380, -inf
    %387 = vmax.xlane.f32.xlu0 %v386
    %v388 = vpop.xlane.xlu0 %387
    %v389 = vsub.f32 %v380, %v388
    %v390 = vmul.f32 %v389, 1.442695
    %v391 = vpow.pop %v390
    %v392 = vsel %vm385, %v391, 0.0
    %393 = vadd.xlane.f32.xlu0 %v392
    %v394 = vpop.xlane.xlu0 %393
    %v395 = vlog2.pop %v394
    %v396 = vmul.f32 %v395, 0.6931472
    %v397 = vsub.f32 %v389, %v396
    %398 = vst.msk [vmem:[#allocation2] sm:$0x3] %vm385, %v397
    // Predicated region
    $region22: #{net_forward.5} parent=1 // pred_check
      _
    $region23: #{net_forward.5} parent=1 // pred_check_branch
      %400 = sbr.rel (0) target = $region25
    $region24: #{net_forward.5} parent=1 // pred_region
      %s402 = ssub.s32 32, 32
      %403 = vsyncadd [#allocation3], %s402
      %s405 = sshll.u32 [#allocation2], 4
      %s406 = int_to_ptr.vmem [resolvable:$true] %s405
      %408 = dma.vmem_to_hbm [thread:$0]  %s406, 32, %s5, [#allocation3]
    $region25: #{net_forward.5} parent=1 // pred_fallthru
      _
    // Predicated region
    $region26: #{net_forward.5} parent=1 // pred_check
      _
    $region27: #{net_forward.5} parent=1 // pred_check_branch
      %410 = sbr.rel (0) target = $region29
    $region28: #{net_forward.5} parent=1 // pred_region
      %411 = dma.done [#allocation3], 32
    $region29: #{net_forward.5} parent=1 // pred_fallthru
      _
    %412 = vsyncpa [#allocation3], 1

</llo_original>
